<compile_context>
chip_gen: v6e
topology: v6e:2x2x1
jax: 0.10.0
libtpu: 0.0.40
codegen_flags: <defaults>
</compile_context>

<pallas_src>
import jax
import jax.numpy as jnp
import numpy as np
from jax.experimental import pallas as pl
from jax.experimental.pallas import tpu as pltpu


def sepconv_kernel(x_ref, dw_ref, pw_ref, o_ref):
    # x_ref : (1, H+2, W+2, Cin)  zero-padded NHWC input (one image)
    # dw_ref: (9, Cin)            depthwise taps, row k = di*3 + dj
    # pw_ref: (Cout, Cin)         pointwise 1x1 weights
    # o_ref : (1, Cout, H*W)      output (NCHW with spatial flattened -> lane dense)
    _, hp, wp, cin = x_ref.shape
    h, w = hp - 2, wp - 2

    x = x_ref[0]                                     # (H+2, W+2, Cin), input dtype

    # Depthwise 3x3: 9 shifted windows, each scaled by a per-channel tap that
    # broadcasts along the lane (channel) axis. Accumulate in f32.
    acc = jnp.zeros((h, w, cin), jnp.float32)
    for di in range(3):
        for dj in range(3):
            tap = dw_ref[di * 3 + dj].astype(jnp.float32)          # (Cin,)
            xs = x[di:di + h, dj:dj + w, :].astype(jnp.float32)    # (H, W, Cin)
            acc = acc + xs * tap

    # Pointwise 1x1 conv == channel contraction on the MXU. Contract Cin of
    # pw (Cout, Cin) against Cin of acc2d (H*W, Cin) so the result comes out
    # as (Cout, H*W): lane-dense stores and NCHW output layout for free.
    acc2d = acc.reshape(h * w, cin)                                # free: W % 8 == 0
    y = jax.lax.dot_general(
        pw_ref[...].astype(jnp.float32), acc2d,
        dimension_numbers=(((1,), (1,)), ((), ())),
        preferred_element_type=jnp.float32)                        # (Cout, H*W)
    o_ref[0] = y.astype(o_ref.dtype)


def separable_conv2d(x, w_dw, w_pw):
    """x: (b, cin, h, w) NCHW; w_dw: (cin, 1, 3, 3); w_pw: (cout, cin, 1, 1)."""
    b, cin, h, w = x.shape
    cout = w_pw.shape[0]
    hw = h * w
    hp, wp = h + 2, w + 2
    itemsize = x.dtype.itemsize

    # Wrapper-side layout plumbing (cheap XLA ops):
    #   zero-pad spatial dims (padding=1), NCHW -> NHWC so channels sit on lanes.
    x_nhwc = jnp.transpose(x, (0, 2, 3, 1))
    x_pad = jnp.pad(x_nhwc, ((0, 0), (1, 1), (1, 1), (0, 0)))

    # Weight plumbing: (cin,1,3,3) -> (9, cin) with row k = di*3+dj; (cout,cin,1,1) -> (cout,cin).
    dw9 = jnp.transpose(w_dw[:, 0], (1, 2, 0)).reshape(9, cin)
    pw = w_pw[:, :, 0, 0]

    in_block_bytes = hp * wp * cin * itemsize
    out_block_bytes = cout * hw * itemsize
    weight_bytes = (9 * cin + cout * cin) * itemsize
    # double-buffered in/out blocks + weights + slack; clamp to a sane range.
    vmem_limit = 2 * (in_block_bytes + out_block_bytes) + weight_bytes + (4 << 20)
    vmem_limit = int(min(max(vmem_limit, 8 << 20), 96 << 20))

    cost = pl.CostEstimate(
        flops=2 * b * hw * cin * (9 + cout),
        transcendentals=0,
        bytes_accessed=int((x_pad.size + dw9.size + pw.size + b * cout * hw) * itemsize),
    )

    out3 = pl.pallas_call(
        sepconv_kernel,
        out_shape=jax.ShapeDtypeStruct((b, cout, hw), x.dtype),
        grid_spec=pltpu.PrefetchScalarGridSpec(
            num_scalar_prefetch=0,
            grid=(b,),
            in_specs=[
                pl.BlockSpec((1, hp, wp, cin), lambda i: (i, 0, 0, 0)),
                pl.BlockSpec((9, cin), lambda i: (0, 0)),
                pl.BlockSpec((cout, cin), lambda i: (0, 0)),
            ],
            out_specs=pl.BlockSpec((1, cout, hw), lambda i: (i, 0, 0)),
        ),
        compiler_params=pltpu.CompilerParams(
            dimension_semantics=("parallel",),
            vmem_limit_bytes=vmem_limit,
        ),
        cost_estimate=cost,
    )(x_pad, dw9, pw)

    return out3.reshape(b, cout, h, w)


def separable_conv2d_ref(x, w_dw, w_pw):
    """Pure-JAX reference mirroring the PyTorch forward (depthwise then pointwise)."""
    cin = x.shape[1]
    dn1 = jax.lax.conv_dimension_numbers(x.shape, w_dw.shape, ("NCHW", "OIHW", "NCHW"))
    y = jax.lax.conv_general_dilated(
        x, w_dw, window_strides=(1, 1), padding=((1, 1), (1, 1)),
        dimension_numbers=dn1, feature_group_count=cin,
        precision=jax.lax.Precision.HIGHEST)
    dn2 = jax.lax.conv_dimension_numbers(y.shape, w_pw.shape, ("NCHW", "OIHW", "NCHW"))
    return jax.lax.conv_general_dilated(
        y, w_pw, window_strides=(1, 1), padding=((0, 0), (0, 0)),
        dimension_numbers=dn2, precision=jax.lax.Precision.HIGHEST)


if __name__ == "__main__":
    batch, cin, cout, spatial = 2, 8, 16, 16   # H*W = 256 -> lane-dense output

    key = jax.random.PRNGKey(0)
    kx, kd, kp = jax.random.split(key, 3)
    x = jax.random.normal(kx, (batch, cin, spatial, spatial), dtype=jnp.float32)
    # PyTorch layouts: depthwise weight (cin, 1, 3, 3), pointwise weight (cout, cin, 1, 1)
    w_dw = jax.random.normal(kd, (cin, 1, 3, 3), dtype=jnp.float32) * 0.2
    w_pw = jax.random.normal(kp, (cout, cin, 1, 1), dtype=jnp.float32) * 0.2

    out = jax.block_until_ready(separable_conv2d(x, w_dw, w_pw))
    ref = jax.block_until_ready(separable_conv2d_ref(x, w_dw, w_pw))
    np.testing.assert_allclose(np.asarray(out), np.asarray(ref), rtol=1e-4, atol=1e-4)

    print("KERNEL_OK")
</pallas_src>

<mosaic_0001>
module attributes {stable_mosaic.version = 11 : i64} {
  func.func @sepconv_kernel(%arg0: i32, %arg1: memref<1x18x18x8xf32, #tpu.memory_space<vmem>>, %arg2: memref<9x8xf32, #tpu.memory_space<vmem>>, %arg3: memref<16x8xf32, #tpu.memory_space<vmem>>, %arg4: memref<1x16x256xf32, #tpu.memory_space<vmem>>) attributes {dimension_semantics = [#tpu.dimension_semantics<parallel>], iteration_bounds = array<i64: 2>, scalar_prefetch = 0 : i64, scratch_operands = 0 : i64, tpu.core_type = #tpu.core_type<tc>, window_params = [{transform_indices = @transform_0, window_bounds = array<i64: 1, 18, 18, 8>}, {pipeline_mode = #tpu.pipeline_mode<synchronous>, transform_indices = @transform_1, window_bounds = array<i64: 9, 8>}, {pipeline_mode = #tpu.pipeline_mode<synchronous>, transform_indices = @transform_2, window_bounds = array<i64: 16, 8>}, {transform_indices = @transform_3, window_bounds = array<i64: 1, 16, 256>}]} {
    %c0 = arith.constant 0 : index
    %c0_0 = arith.constant 0 : index
    %c0_1 = arith.constant 0 : index
    %c0_2 = arith.constant 0 : index
    %0 = vector.load %arg1[%c0, %c0_0, %c0_1, %c0_2] : memref<1x18x18x8xf32, #tpu.memory_space<vmem>>, vector<1x18x18x8xf32>
    %1 = vector.shape_cast %0 : vector<1x18x18x8xf32> to vector<18x18x8xf32>
    %cst = arith.constant 0.000000e+00 : f32
    %2 = vector.broadcast %cst : f32 to vector<16x16x8xf32>
    %c0_3 = arith.constant 0 : index
    %c0_4 = arith.constant 0 : index
    %3 = vector.load %arg2[%c0_3, %c0_4] : memref<9x8xf32, #tpu.memory_space<vmem>>, vector<1x8xf32>
    %4 = vector.shape_cast %3 : vector<1x8xf32> to vector<8xf32>
    %5 = vector.extract_strided_slice %1 {offsets = [0, 0, 0], sizes = [16, 16, 8], strides = [1, 1, 1]} : vector<18x18x8xf32> to vector<16x16x8xf32>
    %6 = vector.shape_cast %4 : vector<8xf32> to vector<1x1x8xf32>
    %7 = vector.broadcast %6 : vector<1x1x8xf32> to vector<16x16x8xf32>
    %8 = arith.mulf %5, %7 : vector<16x16x8xf32>
    %9 = arith.addf %2, %8 : vector<16x16x8xf32>
    %c1 = arith.constant 1 : index
    %c0_5 = arith.constant 0 : index
    %10 = vector.load %arg2[%c1, %c0_5] : memref<9x8xf32, #tpu.memory_space<vmem>>, vector<1x8xf32>
    %11 = vector.shape_cast %10 : vector<1x8xf32> to vector<8xf32>
    %12 = vector.extract_strided_slice %1 {offsets = [0, 1, 0], sizes = [16, 16, 8], strides = [1, 1, 1]} : vector<18x18x8xf32> to vector<16x16x8xf32>
    %13 = vector.shape_cast %11 : vector<8xf32> to vector<1x1x8xf32>
    %14 = vector.broadcast %13 : vector<1x1x8xf32> to vector<16x16x8xf32>
    %15 = arith.mulf %12, %14 : vector<16x16x8xf32>
    %16 = arith.addf %9, %15 : vector<16x16x8xf32>
    %c2 = arith.constant 2 : index
    %c0_6 = arith.constant 0 : index
    %17 = vector.load %arg2[%c2, %c0_6] : memref<9x8xf32, #tpu.memory_space<vmem>>, vector<1x8xf32>
    %18 = vector.shape_cast %17 : vector<1x8xf32> to vector<8xf32>
    %19 = vector.extract_strided_slice %1 {offsets = [0, 2, 0], sizes = [16, 16, 8], strides = [1, 1, 1]} : vector<18x18x8xf32> to vector<16x16x8xf32>
    %20 = vector.shape_cast %18 : vector<8xf32> to vector<1x1x8xf32>
    %21 = vector.broadcast %20 : vector<1x1x8xf32> to vector<16x16x8xf32>
    %22 = arith.mulf %19, %21 : vector<16x16x8xf32>
    %23 = arith.addf %16, %22 : vector<16x16x8xf32>
    %c3 = arith.constant 3 : index
    %c0_7 = arith.constant 0 : index
    %24 = vector.load %arg2[%c3, %c0_7] : memref<9x8xf32, #tpu.memory_space<vmem>>, vector<1x8xf32>
    %25 = vector.shape_cast %24 : vector<1x8xf32> to vector<8xf32>
    %26 = vector.extract_strided_slice %1 {offsets = [1, 0, 0], sizes = [16, 16, 8], strides = [1, 1, 1]} : vector<18x18x8xf32> to vector<16x16x8xf32>
    %27 = vector.shape_cast %25 : vector<8xf32> to vector<1x1x8xf32>
    %28 = vector.broadcast %27 : vector<1x1x8xf32> to vector<16x16x8xf32>
    %29 = arith.mulf %26, %28 : vector<16x16x8xf32>
    %30 = arith.addf %23, %29 : vector<16x16x8xf32>
    %c4 = arith.constant 4 : index
    %c0_8 = arith.constant 0 : index
    %31 = vector.load %arg2[%c4, %c0_8] : memref<9x8xf32, #tpu.memory_space<vmem>>, vector<1x8xf32>
    %32 = vector.shape_cast %31 : vector<1x8xf32> to vector<8xf32>
    %33 = vector.extract_strided_slice %1 {offsets = [1, 1, 0], sizes = [16, 16, 8], strides = [1, 1, 1]} : vector<18x18x8xf32> to vector<16x16x8xf32>
    %34 = vector.shape_cast %32 : vector<8xf32> to vector<1x1x8xf32>
    %35 = vector.broadcast %34 : vector<1x1x8xf32> to vector<16x16x8xf32>
    %36 = arith.mulf %33, %35 : vector<16x16x8xf32>
    %37 = arith.addf %30, %36 : vector<16x16x8xf32>
    %c5 = arith.constant 5 : index
    %c0_9 = arith.constant 0 : index
    %38 = vector.load %arg2[%c5, %c0_9] : memref<9x8xf32, #tpu.memory_space<vmem>>, vector<1x8xf32>
    %39 = vector.shape_cast %38 : vector<1x8xf32> to vector<8xf32>
    %40 = vector.extract_strided_slice %1 {offsets = [1, 2, 0], sizes = [16, 16, 8], strides = [1, 1, 1]} : vector<18x18x8xf32> to vector<16x16x8xf32>
    %41 = vector.shape_cast %39 : vector<8xf32> to vector<1x1x8xf32>
    %42 = vector.broadcast %41 : vector<1x1x8xf32> to vector<16x16x8xf32>
    %43 = arith.mulf %40, %42 : vector<16x16x8xf32>
    %44 = arith.addf %37, %43 : vector<16x16x8xf32>
    %c6 = arith.constant 6 : index
    %c0_10 = arith.constant 0 : index
    %45 = vector.load %arg2[%c6, %c0_10] : memref<9x8xf32, #tpu.memory_space<vmem>>, vector<1x8xf32>
    %46 = vector.shape_cast %45 : vector<1x8xf32> to vector<8xf32>
    %47 = vector.extract_strided_slice %1 {offsets = [2, 0, 0], sizes = [16, 16, 8], strides = [1, 1, 1]} : vector<18x18x8xf32> to vector<16x16x8xf32>
    %48 = vector.shape_cast %46 : vector<8xf32> to vector<1x1x8xf32>
    %49 = vector.broadcast %48 : vector<1x1x8xf32> to vector<16x16x8xf32>
    %50 = arith.mulf %47, %49 : vector<16x16x8xf32>
    %51 = arith.addf %44, %50 : vector<16x16x8xf32>
    %c7 = arith.constant 7 : index
    %c0_11 = arith.constant 0 : index
    %52 = vector.load %arg2[%c7, %c0_11] : memref<9x8xf32, #tpu.memory_space<vmem>>, vector<1x8xf32>
    %53 = vector.shape_cast %52 : vector<1x8xf32> to vector<8xf32>
    %54 = vector.extract_strided_slice %1 {offsets = [2, 1, 0], sizes = [16, 16, 8], strides = [1, 1, 1]} : vector<18x18x8xf32> to vector<16x16x8xf32>
    %55 = vector.shape_cast %53 : vector<8xf32> to vector<1x1x8xf32>
    %56 = vector.broadcast %55 : vector<1x1x8xf32> to vector<16x16x8xf32>
    %57 = arith.mulf %54, %56 : vector<16x16x8xf32>
    %58 = arith.addf %51, %57 : vector<16x16x8xf32>
    %c8 = arith.constant 8 : index
    %c0_12 = arith.constant 0 : index
    %59 = vector.load %arg2[%c8, %c0_12] : memref<9x8xf32, #tpu.memory_space<vmem>>, vector<1x8xf32>
    %60 = vector.shape_cast %59 : vector<1x8xf32> to vector<8xf32>
    %61 = vector.extract_strided_slice %1 {offsets = [2, 2, 0], sizes = [16, 16, 8], strides = [1, 1, 1]} : vector<18x18x8xf32> to vector<16x16x8xf32>
    %62 = vector.shape_cast %60 : vector<8xf32> to vector<1x1x8xf32>
    %63 = vector.broadcast %62 : vector<1x1x8xf32> to vector<16x16x8xf32>
    %64 = arith.mulf %61, %63 : vector<16x16x8xf32>
    %65 = arith.addf %58, %64 : vector<16x16x8xf32>
    %66 = vector.shape_cast %65 : vector<16x16x8xf32> to vector<256x8xf32>
    %c0_13 = arith.constant 0 : index
    %c0_14 = arith.constant 0 : index
    %67 = vector.load %arg3[%c0_13, %c0_14] : memref<16x8xf32, #tpu.memory_space<vmem>>, vector<16x8xf32>
    %cst_15 = arith.constant dense<0.000000e+00> : vector<16x256xf32>
    %68 = tpu.matmul %67, %66, %cst_15 {dimension_numbers = #tpu.dot_dimension_numbers<[1], [1], [0], [0], [0, 0, 1, 0], [], []>} : vector<16x8xf32>, vector<256x8xf32>, vector<16x256xf32> -> vector<16x256xf32>
    %c0_16 = arith.constant 0 : index
    %c0_17 = arith.constant 0 : index
    %c0_18 = arith.constant 0 : index
    %69 = vector.load %arg4[%c0_16, %c0_17, %c0_18] : memref<1x16x256xf32, #tpu.memory_space<vmem>>, vector<1x16x256xf32>
    %70 = vector.shape_cast %69 : vector<1x16x256xf32> to vector<16x256xf32>
    %71 = vector.shape_cast %68 : vector<16x256xf32> to vector<1x16x256xf32>
    tpu.vector_store %arg4[%c0_16, %c0_17, %c0_18], %71 {strides = array<i32>} : memref<1x16x256xf32, #tpu.memory_space<vmem>>, vector<1x16x256xf32>,
    return
  }
  func.func @transform_0(%arg0: i32) -> (i32, i32, i32, i32) {
    %c0_i32 = arith.constant 0 : i32
    %c0_i32_0 = arith.constant 0 : i32
    %c0_i32_1 = arith.constant 0 : i32
    %c0_i32_2 = arith.constant 0 : i32
    return %arg0, %c0_i32, %c0_i32_0, %c0_i32_1 : i32, i32, i32, i32
  }
  func.func @transform_1(%arg0: i32) -> (i32, i32) {
    %c0_i32 = arith.constant 0 : i32
    %c0_i32_0 = arith.constant 0 : i32
    %c0_i32_1 = arith.constant 0 : i32
    return %c0_i32, %c0_i32_0 : i32, i32
  }
  func.func @transform_2(%arg0: i32) -> (i32, i32) {
    %c0_i32 = arith.constant 0 : i32
    %c0_i32_0 = arith.constant 0 : i32
    %c0_i32_1 = arith.constant 0 : i32
    return %c0_i32, %c0_i32_0 : i32, i32
  }
  func.func @transform_3(%arg0: i32) -> (i32, i32, i32) {
    %c0_i32 = arith.constant 0 : i32
    %c0_i32_0 = arith.constant 0 : i32
    %c0_i32_1 = arith.constant 0 : i32
    return %arg0, %c0_i32, %c0_i32_0 : i32, i32, i32
  }
}

</mosaic_0001>

<llo_original>
// kernel: tpu_custom_call.1
$region0: #{tpu_custom_call.1}
  #allocation0 [shape = 'u32[]', space=smem, size = 0x4, offset = 0x4, fixed_abs, tag = 'smem constant byte address 0x4 - core index']
  #allocation1 [shape = 'u32[144,128]{1,0:T(1,128)}', space=vmem, size = 0x12000, scoped, tag = 'internal scratch']
  %s0 = inlined_call_operand.vmem [shape: f32[2,18,18,8], index: 0, kind: input, shape index: {}]
  %s1 = inlined_call_operand.vmem [shape: f32[9,8], index: 1, kind: input, shape index: {}]
  %s2 = inlined_call_operand.vmem [shape: f32[16,8], index: 2, kind: input, shape index: {}]
  %s3 = inlined_call_operand.hbm [shape: f32[2,16,256], index: 3, kind: output, shape index: {}]
  %s4 = sld [smem:[#allocation0]]
  $region45: #{tpu_custom_call.1} parent=0
    _
  %s6 = ssub.s32 1, %s4
  %s7 = scalar_select 0, %s6, %s4
  $region1: #{tpu_custom_call.1} parent=0
    #allocation2 [shape = 'u8[32768]{0}', space=vmem, size = 0x8000, scoped, tag = 'output window, operand 0']
    #allocation3 [shape = 's32[2]{0}', space=sflag, size = 0x8, scoped, tag = 'scoped memory for tpu_custom_call.1']
    %8 = vsyncpa [#allocation3], 0
    %s9 = scalar_lea.sflag [#allocation3], 1
    %10 = vsyncpa %s9, 0
    loop: start=0, step=1, limit=4
    $region2: #{tpu_custom_call.1} parent=1 // loop_pre_header
      _
    $region3: #{tpu_custom_call.1} parent=1 // loop_header
      %s12 = sphi 0, %s16
      %p13 = scmp.ge.s32.totalorder %s12, 4
      %s22 = sphi 0, %s24
      %s25 = sphi 0, %s22
      %s26 = sphi 0, %s25
      %s42 = sphi 0, %s26
      %s46 = sphi 0, %s46
      %s48 = sphi 0, %s46
      %s49 = sphi 0, %s48
      %s63 = sphi 0, %s49
      %s67 = sphi 0, %s67
      %s69 = sphi 0, %s67
      %s70 = sphi 0, %s69
      %s84 = sphi 0, %s70
      %s90 = sphi 0, %s92
      %s93 = sphi 0, %s90
      %s94 = sphi 0, %s93
      %s110 = sphi 0, %s94
    $region4: #{tpu_custom_call.1} parent=1 // loop_header_branch
      %15 = sbr.rel (%p13) target = $region8
    $region5: #{tpu_custom_call.1} parent=1 // loop_body
      %s17 = ssub.s32 %s12, 1
      %s18 = ssub.s32 %s12, 2
      %s19 = sadd.s32 %s12, 1
      %s20 = ssub.s32 %s12, %s19
      %p21 = scmp.eq.s32.totalorder %s20, 0
      %s23 = sadd.s32 %s22, 1
      %s24 = scalar_select %p21, %s22, %s23
      %p27 = pneg %p21
      %p28 = scmp.eq.s32.totalorder %s12, 1
      %p29 = por %p27, %p28
      %p30 = scmp.ne.s32.totalorder %s22, %s25
      %p31 = scmp.eq.s32.totalorder %s12, 0
      %p32 = por %p30, %p31
      %p33 = scmp.ne.s32.totalorder %s22, %s25
      %p34 = scmp.eq.s32.totalorder %s17, 1
      %p35 = por %p33, %p34
      %p36 = scmp.ne.s32.totalorder %s25, %s26
      %p37 = scmp.eq.s32.totalorder %s17, 0
      %p38 = por %p36, %p37
      %p39 = scmp.ne.s32.totalorder %s25, %s26
      %p40 = scmp.eq.s32.totalorder %s18, 1
      %p41 = por %p39, %p40
      %p43 = scmp.ne.s32.totalorder %s26, %s42
      %p44 = scmp.eq.s32.totalorder %s18, 0
      %p45 = por %p43, %p44
      %s47 = sadd.s32 %s46, 1
      %p50 = scmp.eq.s32.totalorder %s12, 1
      %p51 = scmp.ne.s32.totalorder %s46, %s48
      %p52 = scmp.eq.s32.totalorder %s12, 0
      %p53 = por %p51, %p52
      %p54 = scmp.ne.s32.totalorder %s46, %s48
      %p55 = scmp.eq.s32.totalorder %s17, 1
      %p56 = por %p54, %p55
      %p57 = scmp.ne.s32.totalorder %s48, %s49
      %p58 = scmp.eq.s32.totalorder %s17, 0
      %p59 = por %p57, %p58
      %p60 = scmp.ne.s32.totalorder %s48, %s49
      %p61 = scmp.eq.s32.totalorder %s18, 1
      %p62 = por %p60, %p61
      %p64 = scmp.ne.s32.totalorder %s49, %s63
      %p65 = scmp.eq.s32.totalorder %s18, 0
      %p66 = por %p64, %p65
      %s68 = sadd.s32 %s67, 1
      %p71 = scmp.eq.s32.totalorder %s12, 1
      %p72 = scmp.ne.s32.totalorder %s67, %s69
      %p73 = scmp.eq.s32.totalorder %s12, 0
      %p74 = por %p72, %p73
      %p75 = scmp.ne.s32.totalorder %s67, %s69
      %p76 = scmp.eq.s32.totalorder %s17, 1
      %p77 = por %p75, %p76
      %p78 = scmp.ne.s32.totalorder %s69, %s70
      %p79 = scmp.eq.s32.totalorder %s17, 0
      %p80 = por %p78, %p79
      %p81 = scmp.ne.s32.totalorder %s69, %s70
      %p82 = scmp.eq.s32.totalorder %s18, 1
      %p83 = por %p81, %p82
      %p85 = scmp.ne.s32.totalorder %s70, %s84
      %p86 = scmp.eq.s32.totalorder %s18, 0
      %p87 = por %p85, %p86
      %s88 = ssub.s32 %s12, %s19
      %p89 = scmp.eq.s32.totalorder %s88, 0
      %s91 = sadd.s32 %s90, 1
      %s92 = scalar_select %p89, %s90, %s91
      %p95 = pneg %p89
      %p96 = scmp.eq.s32.totalorder %s12, 1
      %p97 = por %p95, %p96
      %p98 = scmp.ne.s32.totalorder %s90, %s93
      %p99 = scmp.eq.s32.totalorder %s12, 0
      %p100 = por %p98, %p99
      %p101 = scmp.ne.s32.totalorder %s90, %s93
      %p102 = scmp.eq.s32.totalorder %s17, 1
      %p103 = por %p101, %p102
      %p104 = scmp.ne.s32.totalorder %s93, %s94
      %p105 = scmp.eq.s32.totalorder %s17, 0
      %p106 = por %p104, %p105
      %p107 = scmp.ne.s32.totalorder %s93, %s94
      %p108 = scmp.eq.s32.totalorder %s18, 1
      %p109 = por %p107, %p108
      %p111 = scmp.ne.s32.totalorder %s94, %s110
      %p112 = scmp.eq.s32.totalorder %s18, 0
      %p113 = por %p111, %p112
      %p114 = scmp.le.s32.totalorder 1, %s12
      %p115 = scmp.lt.s32.totalorder %s12, 3
      %p116 = pnand %p114, %p115
      %p117 = pneg %p116
      // Predicated region
      $region9: #{tpu_custom_call.1} parent=5 // pred_check
        _
      $region10: #{tpu_custom_call.1} parent=5 // pred_check_branch
        %119 = sbr.rel (%p116) target = $region12
      $region11: #{tpu_custom_call.1} parent=5 // pred_region
        %s120 = ssub.s32 %s12, 1
        // Predicated region
        $region13: #{tpu_custom_call.1} parent=11 // pred_check
          %p121 = pneg %p59
        $region14: #{tpu_custom_call.1} parent=11 // pred_check_branch
          %123 = sbr.rel (%p121) target = $region16
        $region15: #{tpu_custom_call.1} parent=11 // pred_region
          _
        $region16: #{tpu_custom_call.1} parent=11 // pred_fallthru
          _
        // Predicated region
        $region17: #{tpu_custom_call.1} parent=11 // pred_check
          %p124 = pneg %p80
        $region18: #{tpu_custom_call.1} parent=11 // pred_check_branch
          %126 = sbr.rel (%p124) target = $region20
        $region19: #{tpu_custom_call.1} parent=11 // pred_region
          _
        $region20: #{tpu_custom_call.1} parent=11 // pred_fallthru
          _
      $region12: #{tpu_custom_call.1} parent=5 // pred_fallthru
        _
      %p127 = scmp.lt.s32.totalorder %s12, 2
      // Predicated region
      $region21: #{tpu_custom_call.1} parent=5 // pred_check
        %p128 = pneg %p127
      $region22: #{tpu_custom_call.1} parent=5 // pred_check_branch
        %130 = sbr.rel (%p128) target = $region24
      $region23: #{tpu_custom_call.1} parent=5 // pred_region
        // Predicated region
        $region25: #{tpu_custom_call.1} parent=23 // pred_check
          %p131 = pneg %p32
        $region26: #{tpu_custom_call.1} parent=23 // pred_check_branch
          %133 = sbr.rel (%p131) target = $region28
        $region27: #{tpu_custom_call.1} parent=23 // pred_region
          %p134 = scmp.lt.s32.totalorder %s12, 1
          %s135 = scalar_select %p134, %s12, 1
          %s136 = smul.addr %s135, 54
          %s137 = smul.addr %s136, 8
          %s138 = scalar_lea.vmem %s0, %s137
        $region28: #{tpu_custom_call.1} parent=23 // pred_fallthru
          _
      $region24: #{tpu_custom_call.1} parent=5 // pred_fallthru
        _
      %p139 = scmp.le.s32.totalorder 1, %s12
      %p140 = scmp.lt.s32.totalorder %s12, 3
      %p141 = pnand %p139, %p140
      %p142 = pneg %p141
      // Predicated region
      $region29: #{tpu_custom_call.1} parent=5 // pred_check
        _
      $region30: #{tpu_custom_call.1} parent=5 // pred_check_branch
        %144 = sbr.rel (%p141) target = $region32
      $region31: #{tpu_custom_call.1} parent=5 // pred_region
        %s145 = ssub.s32 %s12, 1
        %p146 = scmp.lt.s32.totalorder %s17, 1
        %s147 = scalar_select %p146, %s17, 1
        %s148 = smul.addr %s147, 54
        %s149 = smul.addr %s148, 8
        %s150 = scalar_lea.vmem %s0, %s149
        %p151 = pneg %p38
        %p152 = pneg %p35
        %p153 = pneg %p59
        %p154 = pneg %p56
        %p155 = pneg %p80
        %p156 = pneg %p77
        %p157 = pneg %p106
        %p158 = pneg %p103
        %s159 = sand.u32 %s93, 1
        %s160 = scalar_lea.sflag [#allocation3], %s159
        %s161 = sand.u32 %s93, 1
        %s162 = smul.addr %s161, 32
        %s163 = scalar_lea.vmem [#allocation2], %s162
        %p164 = scmp.lt.s32.totalorder %s17, 1
        %s165 = scalar_select %p164, %s17, 1
        %s166 = smul.addr %s165, 54
        %s167 = smul.addr %s166, 8
        %s168 = scalar_lea.vmem %s0, %s167
        %v169 = vld [vmem:[%s168] sm:$0xff]
        %v170 = vld [vmem:[%s168 + $0x8] sm:$0xff]
        %v171 = vld [vmem:[%s168 + $0x10] sm:$0x3]
        %v172 = vld [vmem:[%s168 + $0x18] sm:$0xff]
        %v173 = vld [vmem:[%s168 + $0x20] sm:$0xff]
        %v174 = vld [vmem:[%s168 + $0x28] sm:$0x3]
        %v175 = vld [vmem:[%s168 + $0x30] sm:$0xff]
        %v176 = vld [vmem:[%s168 + $0x38] sm:$0xff]
        %v177 = vld [vmem:[%s168 + $0x40] sm:$0x3]
        %v178 = vld [vmem:[%s168 + $0x48] sm:$0xff]
        %v179 = vld [vmem:[%s168 + $0x50] sm:$0xff]
        %v180 = vld [vmem:[%s168 + $0x58] sm:$0x3]
        %v181 = vld [vmem:[%s168 + $0x60] sm:$0xff]
        %v182 = vld [vmem:[%s168 + $0x68] sm:$0xff]
        %v183 = vld [vmem:[%s168 + $0x70] sm:$0x3]
        %v184 = vld [vmem:[%s168 + $0x78] sm:$0xff]
        %v185 = vld [vmem:[%s168 + $0x80] sm:$0xff]
        %v186 = vld [vmem:[%s168 + $0x88] sm:$0x3]
        %v187 = vld [vmem:[%s168 + $0x90] sm:$0xff]
        %v188 = vld [vmem:[%s168 + $0x98] sm:$0xff]
        %v189 = vld [vmem:[%s168 + $0xa0] sm:$0x3]
        %v190 = vld [vmem:[%s168 + $0xa8] sm:$0xff]
        %v191 = vld [vmem:[%s168 + $0xb0] sm:$0xff]
        %v192 = vld [vmem:[%s168 + $0xb8] sm:$0x3]
        %v193 = vld [vmem:[%s168 + $0xc0] sm:$0xff]
        %v194 = vld [vmem:[%s168 + $0xc8] sm:$0xff]
        %v195 = vld [vmem:[%s168 + $0xd0] sm:$0x3]
        %v196 = vld [vmem:[%s168 + $0xd8] sm:$0xff]
        %v197 = vld [vmem:[%s168 + $0xe0] sm:$0xff]
        %v198 = vld [vmem:[%s168 + $0xe8] sm:$0x3]
        %v199 = vld [vmem:[%s168 + $0xf0] sm:$0xff]
        %v200 = vld [vmem:[%s168 + $0xf8] sm:$0xff]
        %v201 = vld [vmem:[%s168 + $0x100] sm:$0x3]
        %v202 = vld [vmem:[%s168 + $0x108] sm:$0xff]
        %v203 = vld [vmem:[%s168 + $0x110] sm:$0xff]
        %v204 = vld [vmem:[%s168 + $0x118] sm:$0x3]
        %v205 = vld [vmem:[%s168 + $0x120] sm:$0xff]
        %v206 = vld [vmem:[%s168 + $0x128] sm:$0xff]
        %v207 = vld [vmem:[%s168 + $0x130] sm:$0x3]
        %v208 = vld [vmem:[%s168 + $0x138] sm:$0xff]
        %v209 = vld [vmem:[%s168 + $0x140] sm:$0xff]
        %v210 = vld [vmem:[%s168 + $0x148] sm:$0x3]
        %v211 = vld [vmem:[%s168 + $0x150] sm:$0xff]
        %v212 = vld [vmem:[%s168 + $0x158] sm:$0xff]
        %v213 = vld [vmem:[%s168 + $0x160] sm:$0x3]
        %v214 = vld [vmem:[%s168 + $0x168] sm:$0xff]
        %v215 = vld [vmem:[%s168 + $0x170] sm:$0xff]
        %v216 = vld [vmem:[%s168 + $0x178] sm:$0x3]
        %v217 = vld [vmem:[%s168 + $0x180] sm:$0xff]
        %v218 = vld [vmem:[%s168 + $0x188] sm:$0xff]
        %v219 = vld [vmem:[%s168 + $0x190] sm:$0x3]
        %v220 = vld [vmem:[%s168 + $0x198] sm:$0xff]
        %v221 = vld [vmem:[%s168 + $0x1a0] sm:$0xff]
        %v222 = vld [vmem:[%s168 + $0x1a8] sm:$0x3]
        %v223 = vld [vmem:[%s1] sm:$0x1]
        %v224 = vlaneseq
        %v225 = vshrl.u32 %v224, 7
        %v226 = vsub.s32 0, %v225
        %v227 = vrot.slane %v223, %v226
        %v228 = vmul.f32 %v169, %v227
        %v229 = vmul.f32 %v170, %v227
        %v230 = vmul.f32 %v172, %v227
        %v231 = vmul.f32 %v173, %v227
        %v232 = vmul.f32 %v175, %v227
        %v233 = vmul.f32 %v176, %v227
        %v234 = vmul.f32 %v178, %v227
        %v235 = vmul.f32 %v179, %v227
        %v236 = vmul.f32 %v181, %v227
        %v237 = vmul.f32 %v182, %v227
        %v238 = vmul.f32 %v184, %v227
        %v239 = vmul.f32 %v185, %v227
        %v240 = vmul.f32 %v187, %v227
        %v241 = vmul.f32 %v188, %v227
        %v242 = vmul.f32 %v190, %v227
        %v243 = vmul.f32 %v191, %v227
        %v244 = vmul.f32 %v193, %v227
        %v245 = vmul.f32 %v194, %v227
        %v246 = vmul.f32 %v196, %v227
        %v247 = vmul.f32 %v197, %v227
        %v248 = vmul.f32 %v199, %v227
        %v249 = vmul.f32 %v200, %v227
        %v250 = vmul.f32 %v202, %v227
        %v251 = vmul.f32 %v203, %v227
        %v252 = vmul.f32 %v205, %v227
        %v253 = vmul.f32 %v206, %v227
        %v254 = vmul.f32 %v208, %v227
        %v255 = vmul.f32 %v209, %v227
        %v256 = vmul.f32 %v211, %v227
        %v257 = vmul.f32 %v212, %v227
        %v258 = vmul.f32 %v214, %v227
        %v259 = vmul.f32 %v215, %v227
        %v260 = vadd.f32 %v228, 0.0
        %v261 = vadd.f32 %v229, 0.0
        %v262 = vadd.f32 %v230, 0.0
        %v263 = vadd.f32 %v231, 0.0
        %v264 = vadd.f32 %v232, 0.0
        %v265 = vadd.f32 %v233, 0.0
        %v266 = vadd.f32 %v234, 0.0
        %v267 = vadd.f32 %v235, 0.0
        %v268 = vadd.f32 %v236, 0.0
        %v269 = vadd.f32 %v237, 0.0
        %v270 = vadd.f32 %v238, 0.0
        %v271 = vadd.f32 %v239, 0.0
        %v272 = vadd.f32 %v240, 0.0
        %v273 = vadd.f32 %v241, 0.0
        %v274 = vadd.f32 %v242, 0.0
        %v275 = vadd.f32 %v243, 0.0
        %v276 = vadd.f32 %v244, 0.0
        %v277 = vadd.f32 %v245, 0.0
        %v278 = vadd.f32 %v246, 0.0
        %v279 = vadd.f32 %v247, 0.0
        %v280 = vadd.f32 %v248, 0.0
        %v281 = vadd.f32 %v249, 0.0
        %v282 = vadd.f32 %v250, 0.0
        %v283 = vadd.f32 %v251, 0.0
        %v284 = vadd.f32 %v252, 0.0
        %v285 = vadd.f32 %v253, 0.0
        %v286 = vadd.f32 %v254, 0.0
        %v287 = vadd.f32 %v255, 0.0
        %v288 = vadd.f32 %v256, 0.0
        %v289 = vadd.f32 %v257, 0.0
        %v290 = vadd.f32 %v258, 0.0
        %v291 = vadd.f32 %v259, 0.0
        %v292 = vld [vmem:[%s1 + $0x1] sm:$0x1]
        %v293 = vlaneseq
        %v294 = vshrl.u32 %v293, 7
        %v295 = vsub.s32 0, %v294
        %v296 = vrot.slane %v292, %v295
        %v297 = vmul.f32 %v169, %v296
        %v298 = vmul.f32 %v170, %v296
        %v299 = vmul.f32 %v171, %v296
        %v300 = vmul.f32 %v172, %v296
        %v301 = vmul.f32 %v173, %v296
        %v302 = vmul.f32 %v174, %v296
        %v303 = vmul.f32 %v175, %v296
        %v304 = vmul.f32 %v176, %v296
        %v305 = vmul.f32 %v177, %v296
        %v306 = vmul.f32 %v178, %v296
        %v307 = vmul.f32 %v179, %v296
        %v308 = vmul.f32 %v180, %v296
        %v309 = vmul.f32 %v181, %v296
        %v310 = vmul.f32 %v182, %v296
        %v311 = vmul.f32 %v183, %v296
        %v312 = vmul.f32 %v184, %v296
        %v313 = vmul.f32 %v185, %v296
        %v314 = vmul.f32 %v186, %v296
        %v315 = vmul.f32 %v187, %v296
        %v316 = vmul.f32 %v188, %v296
        %v317 = vmul.f32 %v189, %v296
        %v318 = vmul.f32 %v190, %v296
        %v319 = vmul.f32 %v191, %v296
        %v320 = vmul.f32 %v192, %v296
        %v321 = vmul.f32 %v193, %v296
        %v322 = vmul.f32 %v194, %v296
        %v323 = vmul.f32 %v195, %v296
        %v324 = vmul.f32 %v196, %v296
        %v325 = vmul.f32 %v197, %v296
        %v326 = vmul.f32 %v198, %v296
        %v327 = vmul.f32 %v199, %v296
        %v328 = vmul.f32 %v200, %v296
        %v329 = vmul.f32 %v201, %v296
        %v330 = vmul.f32 %v202, %v296
        %v331 = vmul.f32 %v203, %v296
        %v332 = vmul.f32 %v204, %v296
        %v333 = vmul.f32 %v205, %v296
        %v334 = vmul.f32 %v206, %v296
        %v335 = vmul.f32 %v207, %v296
        %v336 = vmul.f32 %v208, %v296
        %v337 = vmul.f32 %v209, %v296
        %v338 = vmul.f32 %v210, %v296
        %v339 = vmul.f32 %v211, %v296
        %v340 = vmul.f32 %v212, %v296
        %v341 = vmul.f32 %v213, %v296
        %v342 = vmul.f32 %v214, %v296
        %v343 = vmul.f32 %v215, %v296
        %v344 = vmul.f32 %v216, %v296
        %vm393 = vcmask 1046528
        %v394 = vrot.slane %v297, 1
        %v395 = vrot.slane %v298, 1
        %v396 = vsel %vm393, %v394, %v395
        %v397 = vrot.slane %v299, 1
        %v398 = vsel %vm393, %v395, %v397
        %v399 = vrot.slane %v300, 1
        %v400 = vrot.slane %v301, 1
        %v401 = vsel %vm393, %v399, %v400
        %v402 = vrot.slane %v302, 1
        %v403 = vsel %vm393, %v400, %v402
        %v404 = vrot.slane %v303, 1
        %v405 = vrot.slane %v304, 1
        %v406 = vsel %vm393, %v404, %v405
        %v407 = vrot.slane %v305, 1
        %v408 = vsel %vm393, %v405, %v407
        %v409 = vrot.slane %v306, 1
        %v410 = vrot.slane %v307, 1
        %v411 = vsel %vm393, %v409, %v410
        %v412 = vrot.slane %v308, 1
        %v413 = vsel %vm393, %v410, %v412
        %v414 = vrot.slane %v309, 1
        %v415 = vrot.slane %v310, 1
        %v416 = vsel %vm393, %v414, %v415
        %v417 = vrot.slane %v311, 1
        %v418 = vsel %vm393, %v415, %v417
        %v419 = vrot.slane %v312, 1
        %v420 = vrot.slane %v313, 1
        %v421 = vsel %vm393, %v419, %v420
        %v422 = vrot.slane %v314, 1
        %v423 = vsel %vm393, %v420, %v422
        %v424 = vrot.slane %v315, 1
        %v425 = vrot.slane %v316, 1
        %v426 = vsel %vm393, %v424, %v425
        %v427 = vrot.slane %v317, 1
        %v428 = vsel %vm393, %v425, %v427
        %v429 = vrot.slane %v318, 1
        %v430 = vrot.slane %v319, 1
        %v431 = vsel %vm393, %v429, %v430
        %v432 = vrot.slane %v320, 1
        %v433 = vsel %vm393, %v430, %v432
        %v434 = vrot.slane %v321, 1
        %v435 = vrot.slane %v322, 1
        %v436 = vsel %vm393, %v434, %v435
        %v437 = vrot.slane %v323, 1
        %v438 = vsel %vm393, %v435, %v437
        %v439 = vrot.slane %v324, 1
        %v440 = vrot.slane %v325, 1
        %v441 = vsel %vm393, %v439, %v440
        %v442 = vrot.slane %v326, 1
        %v443 = vsel %vm393, %v440, %v442
        %v444 = vrot.slane %v327, 1
        %v445 = vrot.slane %v328, 1
        %v446 = vsel %vm393, %v444, %v445
        %v447 = vrot.slane %v329, 1
        %v448 = vsel %vm393, %v445, %v447
        %v449 = vrot.slane %v330, 1
        %v450 = vrot.slane %v331, 1
        %v451 = vsel %vm393, %v449, %v450
        %v452 = vrot.slane %v332, 1
        %v453 = vsel %vm393, %v450, %v452
        %v454 = vrot.slane %v333, 1
        %v455 = vrot.slane %v334, 1
        %v456 = vsel %vm393, %v454, %v455
        %v457 = vrot.slane %v335, 1
        %v458 = vsel %vm393, %v455, %v457
        %v459 = vrot.slane %v336, 1
        %v460 = vrot.slane %v337, 1
        %v461 = vsel %vm393, %v459, %v460
        %v462 = vrot.slane %v338, 1
        %v463 = vsel %vm393, %v460, %v462
        %v464 = vrot.slane %v339, 1
        %v465 = vrot.slane %v340, 1
        %v466 = vsel %vm393, %v464, %v465
        %v467 = vrot.slane %v341, 1
        %v468 = vsel %vm393, %v465, %v467
        %v469 = vrot.slane %v342, 1
        %v470 = vrot.slane %v343, 1
        %v471 = vsel %vm393, %v469, %v470
        %v472 = vrot.slane %v344, 1
        %v473 = vsel %vm393, %v470, %v472
        %v506 = vadd.f32 %v260, %v396
        %v507 = vadd.f32 %v261, %v398
        %v508 = vadd.f32 %v262, %v401
        %v509 = vadd.f32 %v263, %v403
        %v510 = vadd.f32 %v264, %v406
        %v511 = vadd.f32 %v265, %v408
        %v512 = vadd.f32 %v266, %v411
        %v513 = vadd.f32 %v267, %v413
        %v514 = vadd.f32 %v268, %v416
        %v515 = vadd.f32 %v269, %v418
        %v516 = vadd.f32 %v270, %v421
        %v517 = vadd.f32 %v271, %v423
        %v518 = vadd.f32 %v272, %v426
        %v519 = vadd.f32 %v273, %v428
        %v520 = vadd.f32 %v274, %v431
        %v521 = vadd.f32 %v275, %v433
        %v522 = vadd.f32 %v276, %v436
        %v523 = vadd.f32 %v277, %v438
        %v524 = vadd.f32 %v278, %v441
        %v525 = vadd.f32 %v279, %v443
        %v526 = vadd.f32 %v280, %v446
        %v527 = vadd.f32 %v281, %v448
        %v528 = vadd.f32 %v282, %v451
        %v529 = vadd.f32 %v283, %v453
        %v530 = vadd.f32 %v284, %v456
        %v531 = vadd.f32 %v285, %v458
        %v532 = vadd.f32 %v286, %v461
        %v533 = vadd.f32 %v287, %v463
        %v534 = vadd.f32 %v288, %v466
        %v535 = vadd.f32 %v289, %v468
        %v536 = vadd.f32 %v290, %v471
        %v537 = vadd.f32 %v291, %v473
        %v538 = vld [vmem:[%s1 + $0x2] sm:$0x1]
        %v539 = vlaneseq
        %v540 = vshrl.u32 %v539, 7
        %v541 = vsub.s32 0, %v540
        %v542 = vrot.slane %v538, %v541
        %v543 = vmul.f32 %v169, %v542
        %v544 = vmul.f32 %v170, %v542
        %v545 = vmul.f32 %v171, %v542
        %v546 = vmul.f32 %v172, %v542
        %v547 = vmul.f32 %v173, %v542
        %v548 = vmul.f32 %v174, %v542
        %v549 = vmul.f32 %v175, %v542
        %v550 = vmul.f32 %v176, %v542
        %v551 = vmul.f32 %v177, %v542
        %v552 = vmul.f32 %v178, %v542
        %v553 = vmul.f32 %v179, %v542
        %v554 = vmul.f32 %v180, %v542
        %v555 = vmul.f32 %v181, %v542
        %v556 = vmul.f32 %v182, %v542
        %v557 = vmul.f32 %v183, %v542
        %v558 = vmul.f32 %v184, %v542
        %v559 = vmul.f32 %v185, %v542
        %v560 = vmul.f32 %v186, %v542
        %v561 = vmul.f32 %v187, %v542
        %v562 = vmul.f32 %v188, %v542
        %v563 = vmul.f32 %v189, %v542
        %v564 = vmul.f32 %v190, %v542
        %v565 = vmul.f32 %v191, %v542
        %v566 = vmul.f32 %v192, %v542
        %v567 = vmul.f32 %v193, %v542
        %v568 = vmul.f32 %v194, %v542
        %v569 = vmul.f32 %v195, %v542
        %v570 = vmul.f32 %v196, %v542
        %v571 = vmul.f32 %v197, %v542
        %v572 = vmul.f32 %v198, %v542
        %v573 = vmul.f32 %v199, %v542
        %v574 = vmul.f32 %v200, %v542
        %v575 = vmul.f32 %v201, %v542
        %v576 = vmul.f32 %v202, %v542
        %v577 = vmul.f32 %v203, %v542
        %v578 = vmul.f32 %v204, %v542
        %v579 = vmul.f32 %v205, %v542
        %v580 = vmul.f32 %v206, %v542
        %v581 = vmul.f32 %v207, %v542
        %v582 = vmul.f32 %v208, %v542
        %v583 = vmul.f32 %v209, %v542
        %v584 = vmul.f32 %v210, %v542
        %v585 = vmul.f32 %v211, %v542
        %v586 = vmul.f32 %v212, %v542
        %v587 = vmul.f32 %v213, %v542
        %v588 = vmul.f32 %v214, %v542
        %v589 = vmul.f32 %v215, %v542
        %v590 = vmul.f32 %v216, %v542
        %vm639 = vcmask 1045504
        %v640 = vrot.slane %v543, 2
        %v641 = vrot.slane %v544, 2
        %v642 = vsel %vm639, %v640, %v641
        %v643 = vrot.slane %v545, 2
        %v644 = vsel %vm639, %v641, %v643
        %v645 = vrot.slane %v546, 2
        %v646 = vrot.slane %v547, 2
        %v647 = vsel %vm639, %v645, %v646
        %v648 = vrot.slane %v548, 2
        %v649 = vsel %vm639, %v646, %v648
        %v650 = vrot.slane %v549, 2
        %v651 = vrot.slane %v550, 2
        %v652 = vsel %vm639, %v650, %v651
        %v653 = vrot.slane %v551, 2
        %v654 = vsel %vm639, %v651, %v653
        %v655 = vrot.slane %v552, 2
        %v656 = vrot.slane %v553, 2
        %v657 = vsel %vm639, %v655, %v656
        %v658 = vrot.slane %v554, 2
        %v659 = vsel %vm639, %v656, %v658
        %v660 = vrot.slane %v555, 2
        %v661 = vrot.slane %v556, 2
        %v662 = vsel %vm639, %v660, %v661
        %v663 = vrot.slane %v557, 2
        %v664 = vsel %vm639, %v661, %v663
        %v665 = vrot.slane %v558, 2
        %v666 = vrot.slane %v559, 2
        %v667 = vsel %vm639, %v665, %v666
        %v668 = vrot.slane %v560, 2
        %v669 = vsel %vm639, %v666, %v668
        %v670 = vrot.slane %v561, 2
        %v671 = vrot.slane %v562, 2
        %v672 = vsel %vm639, %v670, %v671
        %v673 = vrot.slane %v563, 2
        %v674 = vsel %vm639, %v671, %v673
        %v675 = vrot.slane %v564, 2
        %v676 = vrot.slane %v565, 2
        %v677 = vsel %vm639, %v675, %v676
        %v678 = vrot.slane %v566, 2
        %v679 = vsel %vm639, %v676, %v678
        %v680 = vrot.slane %v567, 2
        %v681 = vrot.slane %v568, 2
        %v682 = vsel %vm639, %v680, %v681
        %v683 = vrot.slane %v569, 2
        %v684 = vsel %vm639, %v681, %v683
        %v685 = vrot.slane %v570, 2
        %v686 = vrot.slane %v571, 2
        %v687 = vsel %vm639, %v685, %v686
        %v688 = vrot.slane %v572, 2
        %v689 = vsel %vm639, %v686, %v688
        %v690 = vrot.slane %v573, 2
        %v691 = vrot.slane %v574, 2
        %v692 = vsel %vm639, %v690, %v691
        %v693 = vrot.slane %v575, 2
        %v694 = vsel %vm639, %v691, %v693
        %v695 = vrot.slane %v576, 2
        %v696 = vrot.slane %v577, 2
        %v697 = vsel %vm639, %v695, %v696
        %v698 = vrot.slane %v578, 2
        %v699 = vsel %vm639, %v696, %v698
        %v700 = vrot.slane %v579, 2
        %v701 = vrot.slane %v580, 2
        %v702 = vsel %vm639, %v700, %v701
        %v703 = vrot.slane %v581, 2
        %v704 = vsel %vm639, %v701, %v703
        %v705 = vrot.slane %v582, 2
        %v706 = vrot.slane %v583, 2
        %v707 = vsel %vm639, %v705, %v706
        %v708 = vrot.slane %v584, 2
        %v709 = vsel %vm639, %v706, %v708
        %v710 = vrot.slane %v585, 2
        %v711 = vrot.slane %v586, 2
        %v712 = vsel %vm639, %v710, %v711
        %v713 = vrot.slane %v587, 2
        %v714 = vsel %vm639, %v711, %v713
        %v715 = vrot.slane %v588, 2
        %v716 = vrot.slane %v589, 2
        %v717 = vsel %vm639, %v715, %v716
        %v718 = vrot.slane %v590, 2
        %v719 = vsel %vm639, %v716, %v718
        %v752 = vadd.f32 %v506, %v642
        %v753 = vadd.f32 %v507, %v644
        %v754 = vadd.f32 %v508, %v647
        %v755 = vadd.f32 %v509, %v649
        %v756 = vadd.f32 %v510, %v652
        %v757 = vadd.f32 %v511, %v654
        %v758 = vadd.f32 %v512, %v657
        %v759 = vadd.f32 %v513, %v659
        %v760 = vadd.f32 %v514, %v662
        %v761 = vadd.f32 %v515, %v664
        %v762 = vadd.f32 %v516, %v667
        %v763 = vadd.f32 %v517, %v669
        %v764 = vadd.f32 %v518, %v672
        %v765 = vadd.f32 %v519, %v674
        %v766 = vadd.f32 %v520, %v677
        %v767 = vadd.f32 %v521, %v679
        %v768 = vadd.f32 %v522, %v682
        %v769 = vadd.f32 %v523, %v684
        %v770 = vadd.f32 %v524, %v687
        %v771 = vadd.f32 %v525, %v689
        %v772 = vadd.f32 %v526, %v692
        %v773 = vadd.f32 %v527, %v694
        %v774 = vadd.f32 %v528, %v697
        %v775 = vadd.f32 %v529, %v699
        %v776 = vadd.f32 %v530, %v702
        %v777 = vadd.f32 %v531, %v704
        %v778 = vadd.f32 %v532, %v707
        %v779 = vadd.f32 %v533, %v709
        %v780 = vadd.f32 %v534, %v712
        %v781 = vadd.f32 %v535, %v714
        %v782 = vadd.f32 %v536, %v717
        %v783 = vadd.f32 %v537, %v719
        %v784 = vld [vmem:[%s1 + $0x3] sm:$0x1]
        %v785 = vlaneseq
        %v786 = vshrl.u32 %v785, 7
        %v787 = vsub.s32 0, %v786
        %v788 = vrot.slane %v784, %v787
        %v789 = vmul.f32 %v172, %v788
        %v790 = vmul.f32 %v173, %v788
        %v791 = vmul.f32 %v175, %v788
        %v792 = vmul.f32 %v176, %v788
        %v793 = vmul.f32 %v178, %v788
        %v794 = vmul.f32 %v179, %v788
        %v795 = vmul.f32 %v181, %v788
        %v796 = vmul.f32 %v182, %v788
        %v797 = vmul.f32 %v184, %v788
        %v798 = vmul.f32 %v185, %v788
        %v799 = vmul.f32 %v187, %v788
        %v800 = vmul.f32 %v188, %v788
        %v801 = vmul.f32 %v190, %v788
        %v802 = vmul.f32 %v191, %v788
        %v803 = vmul.f32 %v193, %v788
        %v804 = vmul.f32 %v194, %v788
        %v805 = vmul.f32 %v196, %v788
        %v806 = vmul.f32 %v197, %v788
        %v807 = vmul.f32 %v199, %v788
        %v808 = vmul.f32 %v200, %v788
        %v809 = vmul.f32 %v202, %v788
        %v810 = vmul.f32 %v203, %v788
        %v811 = vmul.f32 %v205, %v788
        %v812 = vmul.f32 %v206, %v788
        %v813 = vmul.f32 %v208, %v788
        %v814 = vmul.f32 %v209, %v788
        %v815 = vmul.f32 %v211, %v788
        %v816 = vmul.f32 %v212, %v788
        %v817 = vmul.f32 %v214, %v788
        %v818 = vmul.f32 %v215, %v788
        %v819 = vmul.f32 %v217, %v788
        %v820 = vmul.f32 %v218, %v788
        %v821 = vadd.f32 %v752, %v789
        %v822 = vadd.f32 %v753, %v790
        %v823 = vadd.f32 %v754, %v791
        %v824 = vadd.f32 %v755, %v792
        %v825 = vadd.f32 %v756, %v793
        %v826 = vadd.f32 %v757, %v794
        %v827 = vadd.f32 %v758, %v795
        %v828 = vadd.f32 %v759, %v796
        %v829 = vadd.f32 %v760, %v797
        %v830 = vadd.f32 %v761, %v798
        %v831 = vadd.f32 %v762, %v799
        %v832 = vadd.f32 %v763, %v800
        %v833 = vadd.f32 %v764, %v801
        %v834 = vadd.f32 %v765, %v802
        %v835 = vadd.f32 %v766, %v803
        %v836 = vadd.f32 %v767, %v804
        %v837 = vadd.f32 %v768, %v805
        %v838 = vadd.f32 %v769, %v806
        %v839 = vadd.f32 %v770, %v807
        %v840 = vadd.f32 %v771, %v808
        %v841 = vadd.f32 %v772, %v809
        %v842 = vadd.f32 %v773, %v810
        %v843 = vadd.f32 %v774, %v811
        %v844 = vadd.f32 %v775, %v812
        %v845 = vadd.f32 %v776, %v813
        %v846 = vadd.f32 %v777, %v814
        %v847 = vadd.f32 %v778, %v815
        %v848 = vadd.f32 %v779, %v816
        %v849 = vadd.f32 %v780, %v817
        %v850 = vadd.f32 %v781, %v818
        %v851 = vadd.f32 %v782, %v819
        %v852 = vadd.f32 %v783, %v820
        %v853 = vld [vmem:[%s1 + $0x4] sm:$0x1]
        %v854 = vlaneseq
        %v855 = vshrl.u32 %v854, 7
        %v856 = vsub.s32 0, %v855
        %v857 = vrot.slane %v853, %v856
        %v858 = vmul.f32 %v172, %v857
        %v859 = vmul.f32 %v173, %v857
        %v860 = vmul.f32 %v174, %v857
        %v861 = vmul.f32 %v175, %v857
        %v862 = vmul.f32 %v176, %v857
        %v863 = vmul.f32 %v177, %v857
        %v864 = vmul.f32 %v178, %v857
        %v865 = vmul.f32 %v179, %v857
        %v866 = vmul.f32 %v180, %v857
        %v867 = vmul.f32 %v181, %v857
        %v868 = vmul.f32 %v182, %v857
        %v869 = vmul.f32 %v183, %v857
        %v870 = vmul.f32 %v184, %v857
        %v871 = vmul.f32 %v185, %v857
        %v872 = vmul.f32 %v186, %v857
        %v873 = vmul.f32 %v187, %v857
        %v874 = vmul.f32 %v188, %v857
        %v875 = vmul.f32 %v189, %v857
        %v876 = vmul.f32 %v190, %v857
        %v877 = vmul.f32 %v191, %v857
        %v878 = vmul.f32 %v192, %v857
        %v879 = vmul.f32 %v193, %v857
        %v880 = vmul.f32 %v194, %v857
        %v881 = vmul.f32 %v195, %v857
        %v882 = vmul.f32 %v196, %v857
        %v883 = vmul.f32 %v197, %v857
        %v884 = vmul.f32 %v198, %v857
        %v885 = vmul.f32 %v199, %v857
        %v886 = vmul.f32 %v200, %v857
        %v887 = vmul.f32 %v201, %v857
        %v888 = vmul.f32 %v202, %v857
        %v889 = vmul.f32 %v203, %v857
        %v890 = vmul.f32 %v204, %v857
        %v891 = vmul.f32 %v205, %v857
        %v892 = vmul.f32 %v206, %v857
        %v893 = vmul.f32 %v207, %v857
        %v894 = vmul.f32 %v208, %v857
        %v895 = vmul.f32 %v209, %v857
        %v896 = vmul.f32 %v210, %v857
        %v897 = vmul.f32 %v211, %v857
        %v898 = vmul.f32 %v212, %v857
        %v899 = vmul.f32 %v213, %v857
        %v900 = vmul.f32 %v214, %v857
        %v901 = vmul.f32 %v215, %v857
        %v902 = vmul.f32 %v216, %v857
        %v903 = vmul.f32 %v217, %v857
        %v904 = vmul.f32 %v218, %v857
        %v905 = vmul.f32 %v219, %v857
        %v954 = vrot.slane %v858, 1
        %v955 = vrot.slane %v859, 1
        %v956 = vsel %vm393, %v954, %v955
        %v957 = vrot.slane %v860, 1
        %v958 = vsel %vm393, %v955, %v957
        %v959 = vrot.slane %v861, 1
        %v960 = vrot.slane %v862, 1
        %v961 = vsel %vm393, %v959, %v960
        %v962 = vrot.slane %v863, 1
        %v963 = vsel %vm393, %v960, %v962
        %v964 = vrot.slane %v864, 1
        %v965 = vrot.slane %v865, 1
        %v966 = vsel %vm393, %v964, %v965
        %v967 = vrot.slane %v866, 1
        %v968 = vsel %vm393, %v965, %v967
        %v969 = vrot.slane %v867, 1
        %v970 = vrot.slane %v868, 1
        %v971 = vsel %vm393, %v969, %v970
        %v972 = vrot.slane %v869, 1
        %v973 = vsel %vm393, %v970, %v972
        %v974 = vrot.slane %v870, 1
        %v975 = vrot.slane %v871, 1
        %v976 = vsel %vm393, %v974, %v975
        %v977 = vrot.slane %v872, 1
        %v978 = vsel %vm393, %v975, %v977
        %v979 = vrot.slane %v873, 1
        %v980 = vrot.slane %v874, 1
        %v981 = vsel %vm393, %v979, %v980
        %v982 = vrot.slane %v875, 1
        %v983 = vsel %vm393, %v980, %v982
        %v984 = vrot.slane %v876, 1
        %v985 = vrot.slane %v877, 1
        %v986 = vsel %vm393, %v984, %v985
        %v987 = vrot.slane %v878, 1
        %v988 = vsel %vm393, %v985, %v987
        %v989 = vrot.slane %v879, 1
        %v990 = vrot.slane %v880, 1
        %v991 = vsel %vm393, %v989, %v990
        %v992 = vrot.slane %v881, 1
        %v993 = vsel %vm393, %v990, %v992
        %v994 = vrot.slane %v882, 1
        %v995 = vrot.slane %v883, 1
        %v996 = vsel %vm393, %v994, %v995
        %v997 = vrot.slane %v884, 1
        %v998 = vsel %vm393, %v995, %v997
        %v999 = vrot.slane %v885, 1
        %v1000 = vrot.slane %v886, 1
        %v1001 = vsel %vm393, %v999, %v1000
        %v1002 = vrot.slane %v887, 1
        %v1003 = vsel %vm393, %v1000, %v1002
        %v1004 = vrot.slane %v888, 1
        %v1005 = vrot.slane %v889, 1
        %v1006 = vsel %vm393, %v1004, %v1005
        %v1007 = vrot.slane %v890, 1
        %v1008 = vsel %vm393, %v1005, %v1007
        %v1009 = vrot.slane %v891, 1
        %v1010 = vrot.slane %v892, 1
        %v1011 = vsel %vm393, %v1009, %v1010
        %v1012 = vrot.slane %v893, 1
        %v1013 = vsel %vm393, %v1010, %v1012
        %v1014 = vrot.slane %v894, 1
        %v1015 = vrot.slane %v895, 1
        %v1016 = vsel %vm393, %v1014, %v1015
        %v1017 = vrot.slane %v896, 1
        %v1018 = vsel %vm393, %v1015, %v1017
        %v1019 = vrot.slane %v897, 1
        %v1020 = vrot.slane %v898, 1
        %v1021 = vsel %vm393, %v1019, %v1020
        %v1022 = vrot.slane %v899, 1
        %v1023 = vsel %vm393, %v1020, %v1022
        %v1024 = vrot.slane %v900, 1
        %v1025 = vrot.slane %v901, 1
        %v1026 = vsel %vm393, %v1024, %v1025
        %v1027 = vrot.slane %v902, 1
        %v1028 = vsel %vm393, %v1025, %v1027
        %v1029 = vrot.slane %v903, 1
        %v1030 = vrot.slane %v904, 1
        %v1031 = vsel %vm393, %v1029, %v1030
        %v1032 = vrot.slane %v905, 1
        %v1033 = vsel %vm393, %v1030, %v1032
        %v1066 = vadd.f32 %v821, %v956
        %v1067 = vadd.f32 %v822, %v958
        %v1068 = vadd.f32 %v823, %v961
        %v1069 = vadd.f32 %v824, %v963
        %v1070 = vadd.f32 %v825, %v966
        %v1071 = vadd.f32 %v826, %v968
        %v1072 = vadd.f32 %v827, %v971
        %v1073 = vadd.f32 %v828, %v973
        %v1074 = vadd.f32 %v829, %v976
        %v1075 = vadd.f32 %v830, %v978
        %v1076 = vadd.f32 %v831, %v981
        %v1077 = vadd.f32 %v832, %v983
        %v1078 = vadd.f32 %v833, %v986
        %v1079 = vadd.f32 %v834, %v988
        %v1080 = vadd.f32 %v835, %v991
        %v1081 = vadd.f32 %v836, %v993
        %v1082 = vadd.f32 %v837, %v996
        %v1083 = vadd.f32 %v838, %v998
        %v1084 = vadd.f32 %v839, %v1001
        %v1085 = vadd.f32 %v840, %v1003
        %v1086 = vadd.f32 %v841, %v1006
        %v1087 = vadd.f32 %v842, %v1008
        %v1088 = vadd.f32 %v843, %v1011
        %v1089 = vadd.f32 %v844, %v1013
        %v1090 = vadd.f32 %v845, %v1016
        %v1091 = vadd.f32 %v846, %v1018
        %v1092 = vadd.f32 %v847, %v1021
        %v1093 = vadd.f32 %v848, %v1023
        %v1094 = vadd.f32 %v849, %v1026
        %v1095 = vadd.f32 %v850, %v1028
        %v1096 = vadd.f32 %v851, %v1031
        %v1097 = vadd.f32 %v852, %v1033
        %v1098 = vld [vmem:[%s1 + $0x5] sm:$0x1]
        %v1099 = vlaneseq
        %v1100 = vshrl.u32 %v1099, 7
        %v1101 = vsub.s32 0, %v1100
        %v1102 = vrot.slane %v1098, %v1101
        %v1103 = vmul.f32 %v172, %v1102
        %v1104 = vmul.f32 %v173, %v1102
        %v1105 = vmul.f32 %v174, %v1102
        %v1106 = vmul.f32 %v175, %v1102
        %v1107 = vmul.f32 %v176, %v1102
        %v1108 = vmul.f32 %v177, %v1102
        %v1109 = vmul.f32 %v178, %v1102
        %v1110 = vmul.f32 %v179, %v1102
        %v1111 = vmul.f32 %v180, %v1102
        %v1112 = vmul.f32 %v181, %v1102
        %v1113 = vmul.f32 %v182, %v1102
        %v1114 = vmul.f32 %v183, %v1102
        %v1115 = vmul.f32 %v184, %v1102
        %v1116 = vmul.f32 %v185, %v1102
        %v1117 = vmul.f32 %v186, %v1102
        %v1118 = vmul.f32 %v187, %v1102
        %v1119 = vmul.f32 %v188, %v1102
        %v1120 = vmul.f32 %v189, %v1102
        %v1121 = vmul.f32 %v190, %v1102
        %v1122 = vmul.f32 %v191, %v1102
        %v1123 = vmul.f32 %v192, %v1102
        %v1124 = vmul.f32 %v193, %v1102
        %v1125 = vmul.f32 %v194, %v1102
        %v1126 = vmul.f32 %v195, %v1102
        %v1127 = vmul.f32 %v196, %v1102
        %v1128 = vmul.f32 %v197, %v1102
        %v1129 = vmul.f32 %v198, %v1102
        %v1130 = vmul.f32 %v199, %v1102
        %v1131 = vmul.f32 %v200, %v1102
        %v1132 = vmul.f32 %v201, %v1102
        %v1133 = vmul.f32 %v202, %v1102
        %v1134 = vmul.f32 %v203, %v1102
        %v1135 = vmul.f32 %v204, %v1102
        %v1136 = vmul.f32 %v205, %v1102
        %v1137 = vmul.f32 %v206, %v1102
        %v1138 = vmul.f32 %v207, %v1102
        %v1139 = vmul.f32 %v208, %v1102
        %v1140 = vmul.f32 %v209, %v1102
        %v1141 = vmul.f32 %v210, %v1102
        %v1142 = vmul.f32 %v211, %v1102
        %v1143 = vmul.f32 %v212, %v1102
        %v1144 = vmul.f32 %v213, %v1102
        %v1145 = vmul.f32 %v214, %v1102
        %v1146 = vmul.f32 %v215, %v1102
        %v1147 = vmul.f32 %v216, %v1102
        %v1148 = vmul.f32 %v217, %v1102
        %v1149 = vmul.f32 %v218, %v1102
        %v1150 = vmul.f32 %v219, %v1102
        %v1199 = vrot.slane %v1103, 2
        %v1200 = vrot.slane %v1104, 2
        %v1201 = vsel %vm639, %v1199, %v1200
        %v1202 = vrot.slane %v1105, 2
        %v1203 = vsel %vm639, %v1200, %v1202
        %v1204 = vrot.slane %v1106, 2
        %v1205 = vrot.slane %v1107, 2
        %v1206 = vsel %vm639, %v1204, %v1205
        %v1207 = vrot.slane %v1108, 2
        %v1208 = vsel %vm639, %v1205, %v1207
        %v1209 = vrot.slane %v1109, 2
        %v1210 = vrot.slane %v1110, 2
        %v1211 = vsel %vm639, %v1209, %v1210
        %v1212 = vrot.slane %v1111, 2
        %v1213 = vsel %vm639, %v1210, %v1212
        %v1214 = vrot.slane %v1112, 2
        %v1215 = vrot.slane %v1113, 2
        %v1216 = vsel %vm639, %v1214, %v1215
        %v1217 = vrot.slane %v1114, 2
        %v1218 = vsel %vm639, %v1215, %v1217
        %v1219 = vrot.slane %v1115, 2
        %v1220 = vrot.slane %v1116, 2
        %v1221 = vsel %vm639, %v1219, %v1220
        %v1222 = vrot.slane %v1117, 2
        %v1223 = vsel %vm639, %v1220, %v1222
        %v1224 = vrot.slane %v1118, 2
        %v1225 = vrot.slane %v1119, 2
        %v1226 = vsel %vm639, %v1224, %v1225
        %v1227 = vrot.slane %v1120, 2
        %v1228 = vsel %vm639, %v1225, %v1227
        %v1229 = vrot.slane %v1121, 2
        %v1230 = vrot.slane %v1122, 2
        %v1231 = vsel %vm639, %v1229, %v1230
        %v1232 = vrot.slane %v1123, 2
        %v1233 = vsel %vm639, %v1230, %v1232
        %v1234 = vrot.slane %v1124, 2
        %v1235 = vrot.slane %v1125, 2
        %v1236 = vsel %vm639, %v1234, %v1235
        %v1237 = vrot.slane %v1126, 2
        %v1238 = vsel %vm639, %v1235, %v1237
        %v1239 = vrot.slane %v1127, 2
        %v1240 = vrot.slane %v1128, 2
        %v1241 = vsel %vm639, %v1239, %v1240
        %v1242 = vrot.slane %v1129, 2
        %v1243 = vsel %vm639, %v1240, %v1242
        %v1244 = vrot.slane %v1130, 2
        %v1245 = vrot.slane %v1131, 2
        %v1246 = vsel %vm639, %v1244, %v1245
        %v1247 = vrot.slane %v1132, 2
        %v1248 = vsel %vm639, %v1245, %v1247
        %v1249 = vrot.slane %v1133, 2
        %v1250 = vrot.slane %v1134, 2
        %v1251 = vsel %vm639, %v1249, %v1250
        %v1252 = vrot.slane %v1135, 2
        %v1253 = vsel %vm639, %v1250, %v1252
        %v1254 = vrot.slane %v1136, 2
        %v1255 = vrot.slane %v1137, 2
        %v1256 = vsel %vm639, %v1254, %v1255
        %v1257 = vrot.slane %v1138, 2
        %v1258 = vsel %vm639, %v1255, %v1257
        %v1259 = vrot.slane %v1139, 2
        %v1260 = vrot.slane %v1140, 2
        %v1261 = vsel %vm639, %v1259, %v1260
        %v1262 = vrot.slane %v1141, 2
        %v1263 = vsel %vm639, %v1260, %v1262
        %v1264 = vrot.slane %v1142, 2
        %v1265 = vrot.slane %v1143, 2
        %v1266 = vsel %vm639, %v1264, %v1265
        %v1267 = vrot.slane %v1144, 2
        %v1268 = vsel %vm639, %v1265, %v1267
        %v1269 = vrot.slane %v1145, 2
        %v1270 = vrot.slane %v1146, 2
        %v1271 = vsel %vm639, %v1269, %v1270
        %v1272 = vrot.slane %v1147, 2
        %v1273 = vsel %vm639, %v1270, %v1272
        %v1274 = vrot.slane %v1148, 2
        %v1275 = vrot.slane %v1149, 2
        %v1276 = vsel %vm639, %v1274, %v1275
        %v1277 = vrot.slane %v1150, 2
        %v1278 = vsel %vm639, %v1275, %v1277
        %v1311 = vadd.f32 %v1066, %v1201
        %v1312 = vadd.f32 %v1067, %v1203
        %v1313 = vadd.f32 %v1068, %v1206
        %v1314 = vadd.f32 %v1069, %v1208
        %v1315 = vadd.f32 %v1070, %v1211
        %v1316 = vadd.f32 %v1071, %v1213
        %v1317 = vadd.f32 %v1072, %v1216
        %v1318 = vadd.f32 %v1073, %v1218
        %v1319 = vadd.f32 %v1074, %v1221
        %v1320 = vadd.f32 %v1075, %v1223
        %v1321 = vadd.f32 %v1076, %v1226
        %v1322 = vadd.f32 %v1077, %v1228
        %v1323 = vadd.f32 %v1078, %v1231
        %v1324 = vadd.f32 %v1079, %v1233
        %v1325 = vadd.f32 %v1080, %v1236
        %v1326 = vadd.f32 %v1081, %v1238
        %v1327 = vadd.f32 %v1082, %v1241
        %v1328 = vadd.f32 %v1083, %v1243
        %v1329 = vadd.f32 %v1084, %v1246
        %v1330 = vadd.f32 %v1085, %v1248
        %v1331 = vadd.f32 %v1086, %v1251
        %v1332 = vadd.f32 %v1087, %v1253
        %v1333 = vadd.f32 %v1088, %v1256
        %v1334 = vadd.f32 %v1089, %v1258
        %v1335 = vadd.f32 %v1090, %v1261
        %v1336 = vadd.f32 %v1091, %v1263
        %v1337 = vadd.f32 %v1092, %v1266
        %v1338 = vadd.f32 %v1093, %v1268
        %v1339 = vadd.f32 %v1094, %v1271
        %v1340 = vadd.f32 %v1095, %v1273
        %v1341 = vadd.f32 %v1096, %v1276
        %v1342 = vadd.f32 %v1097, %v1278
        %v1343 = vld [vmem:[%s1 + $0x6] sm:$0x1]
        %v1344 = vlaneseq
        %v1345 = vshrl.u32 %v1344, 7
        %v1346 = vsub.s32 0, %v1345
        %v1347 = vrot.slane %v1343, %v1346
        %v1348 = vmul.f32 %v175, %v1347
        %v1349 = vmul.f32 %v176, %v1347
        %v1350 = vmul.f32 %v178, %v1347
        %v1351 = vmul.f32 %v179, %v1347
        %v1352 = vmul.f32 %v181, %v1347
        %v1353 = vmul.f32 %v182, %v1347
        %v1354 = vmul.f32 %v184, %v1347
        %v1355 = vmul.f32 %v185, %v1347
        %v1356 = vmul.f32 %v187, %v1347
        %v1357 = vmul.f32 %v188, %v1347
        %v1358 = vmul.f32 %v190, %v1347
        %v1359 = vmul.f32 %v191, %v1347
        %v1360 = vmul.f32 %v193, %v1347
        %v1361 = vmul.f32 %v194, %v1347
        %v1362 = vmul.f32 %v196, %v1347
        %v1363 = vmul.f32 %v197, %v1347
        %v1364 = vmul.f32 %v199, %v1347
        %v1365 = vmul.f32 %v200, %v1347
        %v1366 = vmul.f32 %v202, %v1347
        %v1367 = vmul.f32 %v203, %v1347
        %v1368 = vmul.f32 %v205, %v1347
        %v1369 = vmul.f32 %v206, %v1347
        %v1370 = vmul.f32 %v208, %v1347
        %v1371 = vmul.f32 %v209, %v1347
        %v1372 = vmul.f32 %v211, %v1347
        %v1373 = vmul.f32 %v212, %v1347
        %v1374 = vmul.f32 %v214, %v1347
        %v1375 = vmul.f32 %v215, %v1347
        %v1376 = vmul.f32 %v217, %v1347
        %v1377 = vmul.f32 %v218, %v1347
        %v1378 = vmul.f32 %v220, %v1347
        %v1379 = vmul.f32 %v221, %v1347
        %v1380 = vadd.f32 %v1311, %v1348
        %v1381 = vadd.f32 %v1312, %v1349
        %v1382 = vadd.f32 %v1313, %v1350
        %v1383 = vadd.f32 %v1314, %v1351
        %v1384 = vadd.f32 %v1315, %v1352
        %v1385 = vadd.f32 %v1316, %v1353
        %v1386 = vadd.f32 %v1317, %v1354
        %v1387 = vadd.f32 %v1318, %v1355
        %v1388 = vadd.f32 %v1319, %v1356
        %v1389 = vadd.f32 %v1320, %v1357
        %v1390 = vadd.f32 %v1321, %v1358
        %v1391 = vadd.f32 %v1322, %v1359
        %v1392 = vadd.f32 %v1323, %v1360
        %v1393 = vadd.f32 %v1324, %v1361
        %v1394 = vadd.f32 %v1325, %v1362
        %v1395 = vadd.f32 %v1326, %v1363
        %v1396 = vadd.f32 %v1327, %v1364
        %v1397 = vadd.f32 %v1328, %v1365
        %v1398 = vadd.f32 %v1329, %v1366
        %v1399 = vadd.f32 %v1330, %v1367
        %v1400 = vadd.f32 %v1331, %v1368
        %v1401 = vadd.f32 %v1332, %v1369
        %v1402 = vadd.f32 %v1333, %v1370
        %v1403 = vadd.f32 %v1334, %v1371
        %v1404 = vadd.f32 %v1335, %v1372
        %v1405 = vadd.f32 %v1336, %v1373
        %v1406 = vadd.f32 %v1337, %v1374
        %v1407 = vadd.f32 %v1338, %v1375
        %v1408 = vadd.f32 %v1339, %v1376
        %v1409 = vadd.f32 %v1340, %v1377
        %v1410 = vadd.f32 %v1341, %v1378
        %v1411 = vadd.f32 %v1342, %v1379
        %v1412 = vld [vmem:[%s1 + $0x7] sm:$0x1]
        %v1413 = vlaneseq
        %v1414 = vshrl.u32 %v1413, 7
        %v1415 = vsub.s32 0, %v1414
        %v1416 = vrot.slane %v1412, %v1415
        %v1417 = vmul.f32 %v175, %v1416
        %v1418 = vmul.f32 %v176, %v1416
        %v1419 = vmul.f32 %v177, %v1416
        %v1420 = vmul.f32 %v178, %v1416
        %v1421 = vmul.f32 %v179, %v1416
        %v1422 = vmul.f32 %v180, %v1416
        %v1423 = vmul.f32 %v181, %v1416
        %v1424 = vmul.f32 %v182, %v1416
        %v1425 = vmul.f32 %v183, %v1416
        %v1426 = vmul.f32 %v184, %v1416
        %v1427 = vmul.f32 %v185, %v1416
        %v1428 = vmul.f32 %v186, %v1416
        %v1429 = vmul.f32 %v187, %v1416
        %v1430 = vmul.f32 %v188, %v1416
        %v1431 = vmul.f32 %v189, %v1416
        %v1432 = vmul.f32 %v190, %v1416
        %v1433 = vmul.f32 %v191, %v1416
        %v1434 = vmul.f32 %v192, %v1416
        %v1435 = vmul.f32 %v193, %v1416
        %v1436 = vmul.f32 %v194, %v1416
        %v1437 = vmul.f32 %v195, %v1416
        %v1438 = vmul.f32 %v196, %v1416
        %v1439 = vmul.f32 %v197, %v1416
        %v1440 = vmul.f32 %v198, %v1416
        %v1441 = vmul.f32 %v199, %v1416
        %v1442 = vmul.f32 %v200, %v1416
        %v1443 = vmul.f32 %v201, %v1416
        %v1444 = vmul.f32 %v202, %v1416
        %v1445 = vmul.f32 %v203, %v1416
        %v1446 = vmul.f32 %v204, %v1416
        %v1447 = vmul.f32 %v205, %v1416
        %v1448 = vmul.f32 %v206, %v1416
        %v1449 = vmul.f32 %v207, %v1416
        %v1450 = vmul.f32 %v208, %v1416
        %v1451 = vmul.f32 %v209, %v1416
        %v1452 = vmul.f32 %v210, %v1416
        %v1453 = vmul.f32 %v211, %v1416
        %v1454 = vmul.f32 %v212, %v1416
        %v1455 = vmul.f32 %v213, %v1416
        %v1456 = vmul.f32 %v214, %v1416
        %v1457 = vmul.f32 %v215, %v1416
        %v1458 = vmul.f32 %v216, %v1416
        %v1459 = vmul.f32 %v217, %v1416
        %v1460 = vmul.f32 %v218, %v1416
        %v1461 = vmul.f32 %v219, %v1416
        %v1462 = vmul.f32 %v220, %v1416
        %v1463 = vmul.f32 %v221, %v1416
        %v1464 = vmul.f32 %v222, %v1416
        %v1513 = vrot.slane %v1417, 1
        %v1514 = vrot.slane %v1418, 1
        %v1515 = vsel %vm393, %v1513, %v1514
        %v1516 = vrot.slane %v1419, 1
        %v1517 = vsel %vm393, %v1514, %v1516
        %v1518 = vrot.slane %v1420, 1
        %v1519 = vrot.slane %v1421, 1
        %v1520 = vsel %vm393, %v1518, %v1519
        %v1521 = vrot.slane %v1422, 1
        %v1522 = vsel %vm393, %v1519, %v1521
        %v1523 = vrot.slane %v1423, 1
        %v1524 = vrot.slane %v1424, 1
        %v1525 = vsel %vm393, %v1523, %v1524
        %v1526 = vrot.slane %v1425, 1
        %v1527 = vsel %vm393, %v1524, %v1526
        %v1528 = vrot.slane %v1426, 1
        %v1529 = vrot.slane %v1427, 1
        %v1530 = vsel %vm393, %v1528, %v1529
        %v1531 = vrot.slane %v1428, 1
        %v1532 = vsel %vm393, %v1529, %v1531
        %v1533 = vrot.slane %v1429, 1
        %v1534 = vrot.slane %v1430, 1
        %v1535 = vsel %vm393, %v1533, %v1534
        %v1536 = vrot.slane %v1431, 1
        %v1537 = vsel %vm393, %v1534, %v1536
        %v1538 = vrot.slane %v1432, 1
        %v1539 = vrot.slane %v1433, 1
        %v1540 = vsel %vm393, %v1538, %v1539
        %v1541 = vrot.slane %v1434, 1
        %v1542 = vsel %vm393, %v1539, %v1541
        %v1543 = vrot.slane %v1435, 1
        %v1544 = vrot.slane %v1436, 1
        %v1545 = vsel %vm393, %v1543, %v1544
        %v1546 = vrot.slane %v1437, 1
        %v1547 = vsel %vm393, %v1544, %v1546
        %v1548 = vrot.slane %v1438, 1
        %v1549 = vrot.slane %v1439, 1
        %v1550 = vsel %vm393, %v1548, %v1549
        %v1551 = vrot.slane %v1440, 1
        %v1552 = vsel %vm393, %v1549, %v1551
        %v1553 = vrot.slane %v1441, 1
        %v1554 = vrot.slane %v1442, 1
        %v1555 = vsel %vm393, %v1553, %v1554
        %v1556 = vrot.slane %v1443, 1
        %v1557 = vsel %vm393, %v1554, %v1556
        %v1558 = vrot.slane %v1444, 1
        %v1559 = vrot.slane %v1445, 1
        %v1560 = vsel %vm393, %v1558, %v1559
        %v1561 = vrot.slane %v1446, 1
        %v1562 = vsel %vm393, %v1559, %v1561
        %v1563 = vrot.slane %v1447, 1
        %v1564 = vrot.slane %v1448, 1
        %v1565 = vsel %vm393, %v1563, %v1564
        %v1566 = vrot.slane %v1449, 1
        %v1567 = vsel %vm393, %v1564, %v1566
        %v1568 = vrot.slane %v1450, 1
        %v1569 = vrot.slane %v1451, 1
        %v1570 = vsel %vm393, %v1568, %v1569
        %v1571 = vrot.slane %v1452, 1
        %v1572 = vsel %vm393, %v1569, %v1571
        %v1573 = vrot.slane %v1453, 1
        %v1574 = vrot.slane %v1454, 1
        %v1575 = vsel %vm393, %v1573, %v1574
        %v1576 = vrot.slane %v1455, 1
        %v1577 = vsel %vm393, %v1574, %v1576
        %v1578 = vrot.slane %v1456, 1
        %v1579 = vrot.slane %v1457, 1
        %v1580 = vsel %vm393, %v1578, %v1579
        %v1581 = vrot.slane %v1458, 1
        %v1582 = vsel %vm393, %v1579, %v1581
        %v1583 = vrot.slane %v1459, 1
        %v1584 = vrot.slane %v1460, 1
        %v1585 = vsel %vm393, %v1583, %v1584
        %v1586 = vrot.slane %v1461, 1
        %v1587 = vsel %vm393, %v1584, %v1586
        %v1588 = vrot.slane %v1462, 1
        %v1589 = vrot.slane %v1463, 1
        %v1590 = vsel %vm393, %v1588, %v1589
        %v1591 = vrot.slane %v1464, 1
        %v1592 = vsel %vm393, %v1589, %v1591
        %v1625 = vadd.f32 %v1380, %v1515
        %v1626 = vadd.f32 %v1381, %v1517
        %v1627 = vadd.f32 %v1382, %v1520
        %v1628 = vadd.f32 %v1383, %v1522
        %v1629 = vadd.f32 %v1384, %v1525
        %v1630 = vadd.f32 %v1385, %v1527
        %v1631 = vadd.f32 %v1386, %v1530
        %v1632 = vadd.f32 %v1387, %v1532
        %v1633 = vadd.f32 %v1388, %v1535
        %v1634 = vadd.f32 %v1389, %v1537
        %v1635 = vadd.f32 %v1390, %v1540
        %v1636 = vadd.f32 %v1391, %v1542
        %v1637 = vadd.f32 %v1392, %v1545
        %v1638 = vadd.f32 %v1393, %v1547
        %v1639 = vadd.f32 %v1394, %v1550
        %v1640 = vadd.f32 %v1395, %v1552
        %v1641 = vadd.f32 %v1396, %v1555
        %v1642 = vadd.f32 %v1397, %v1557
        %v1643 = vadd.f32 %v1398, %v1560
        %v1644 = vadd.f32 %v1399, %v1562
        %v1645 = vadd.f32 %v1400, %v1565
        %v1646 = vadd.f32 %v1401, %v1567
        %v1647 = vadd.f32 %v1402, %v1570
        %v1648 = vadd.f32 %v1403, %v1572
        %v1649 = vadd.f32 %v1404, %v1575
        %v1650 = vadd.f32 %v1405, %v1577
        %v1651 = vadd.f32 %v1406, %v1580
        %v1652 = vadd.f32 %v1407, %v1582
        %v1653 = vadd.f32 %v1408, %v1585
        %v1654 = vadd.f32 %v1409, %v1587
        %v1655 = vadd.f32 %v1410, %v1590
        %v1656 = vadd.f32 %v1411, %v1592
        %v1657 = vld [vmem:[%s1 + $0x8] sm:$0x1]
        %v1658 = vlaneseq
        %v1659 = vshrl.u32 %v1658, 7
        %v1660 = vsub.s32 0, %v1659
        %v1661 = vrot.slane %v1657, %v1660
        %v1662 = vmul.f32 %v175, %v1661
        %v1663 = vmul.f32 %v176, %v1661
        %v1664 = vmul.f32 %v177, %v1661
        %v1665 = vmul.f32 %v178, %v1661
        %v1666 = vmul.f32 %v179, %v1661
        %v1667 = vmul.f32 %v180, %v1661
        %v1668 = vmul.f32 %v181, %v1661
        %v1669 = vmul.f32 %v182, %v1661
        %v1670 = vmul.f32 %v183, %v1661
        %v1671 = vmul.f32 %v184, %v1661
        %v1672 = vmul.f32 %v185, %v1661
        %v1673 = vmul.f32 %v186, %v1661
        %v1674 = vmul.f32 %v187, %v1661
        %v1675 = vmul.f32 %v188, %v1661
        %v1676 = vmul.f32 %v189, %v1661
        %v1677 = vmul.f32 %v190, %v1661
        %v1678 = vmul.f32 %v191, %v1661
        %v1679 = vmul.f32 %v192, %v1661
        %v1680 = vmul.f32 %v193, %v1661
        %v1681 = vmul.f32 %v194, %v1661
        %v1682 = vmul.f32 %v195, %v1661
        %v1683 = vmul.f32 %v196, %v1661
        %v1684 = vmul.f32 %v197, %v1661
        %v1685 = vmul.f32 %v198, %v1661
        %v1686 = vmul.f32 %v199, %v1661
        %v1687 = vmul.f32 %v200, %v1661
        %v1688 = vmul.f32 %v201, %v1661
        %v1689 = vmul.f32 %v202, %v1661
        %v1690 = vmul.f32 %v203, %v1661
        %v1691 = vmul.f32 %v204, %v1661
        %v1692 = vmul.f32 %v205, %v1661
        %v1693 = vmul.f32 %v206, %v1661
        %v1694 = vmul.f32 %v207, %v1661
        %v1695 = vmul.f32 %v208, %v1661
        %v1696 = vmul.f32 %v209, %v1661
        %v1697 = vmul.f32 %v210, %v1661
        %v1698 = vmul.f32 %v211, %v1661
        %v1699 = vmul.f32 %v212, %v1661
        %v1700 = vmul.f32 %v213, %v1661
        %v1701 = vmul.f32 %v214, %v1661
        %v1702 = vmul.f32 %v215, %v1661
        %v1703 = vmul.f32 %v216, %v1661
        %v1704 = vmul.f32 %v217, %v1661
        %v1705 = vmul.f32 %v218, %v1661
        %v1706 = vmul.f32 %v219, %v1661
        %v1707 = vmul.f32 %v220, %v1661
        %v1708 = vmul.f32 %v221, %v1661
        %v1709 = vmul.f32 %v222, %v1661
        %v1758 = vrot.slane %v1662, 2
        %v1759 = vrot.slane %v1663, 2
        %v1760 = vsel %vm639, %v1758, %v1759
        %v1761 = vrot.slane %v1664, 2
        %v1762 = vsel %vm639, %v1759, %v1761
        %v1763 = vrot.slane %v1665, 2
        %v1764 = vrot.slane %v1666, 2
        %v1765 = vsel %vm639, %v1763, %v1764
        %v1766 = vrot.slane %v1667, 2
        %v1767 = vsel %vm639, %v1764, %v1766
        %v1768 = vrot.slane %v1668, 2
        %v1769 = vrot.slane %v1669, 2
        %v1770 = vsel %vm639, %v1768, %v1769
        %v1771 = vrot.slane %v1670, 2
        %v1772 = vsel %vm639, %v1769, %v1771
        %v1773 = vrot.slane %v1671, 2
        %v1774 = vrot.slane %v1672, 2
        %v1775 = vsel %vm639, %v1773, %v1774
        %v1776 = vrot.slane %v1673, 2
        %v1777 = vsel %vm639, %v1774, %v1776
        %v1778 = vrot.slane %v1674, 2
        %v1779 = vrot.slane %v1675, 2
        %v1780 = vsel %vm639, %v1778, %v1779
        %v1781 = vrot.slane %v1676, 2
        %v1782 = vsel %vm639, %v1779, %v1781
        %v1783 = vrot.slane %v1677, 2
        %v1784 = vrot.slane %v1678, 2
        %v1785 = vsel %vm639, %v1783, %v1784
        %v1786 = vrot.slane %v1679, 2
        %v1787 = vsel %vm639, %v1784, %v1786
        %v1788 = vrot.slane %v1680, 2
        %v1789 = vrot.slane %v1681, 2
        %v1790 = vsel %vm639, %v1788, %v1789
        %v1791 = vrot.slane %v1682, 2
        %v1792 = vsel %vm639, %v1789, %v1791
        %v1793 = vrot.slane %v1683, 2
        %v1794 = vrot.slane %v1684, 2
        %v1795 = vsel %vm639, %v1793, %v1794
        %v1796 = vrot.slane %v1685, 2
        %v1797 = vsel %vm639, %v1794, %v1796
        %v1798 = vrot.slane %v1686, 2
        %v1799 = vrot.slane %v1687, 2
        %v1800 = vsel %vm639, %v1798, %v1799
        %v1801 = vrot.slane %v1688, 2
        %v1802 = vsel %vm639, %v1799, %v1801
        %v1803 = vrot.slane %v1689, 2
        %v1804 = vrot.slane %v1690, 2
        %v1805 = vsel %vm639, %v1803, %v1804
        %v1806 = vrot.slane %v1691, 2
        %v1807 = vsel %vm639, %v1804, %v1806
        %v1808 = vrot.slane %v1692, 2
        %v1809 = vrot.slane %v1693, 2
        %v1810 = vsel %vm639, %v1808, %v1809
        %v1811 = vrot.slane %v1694, 2
        %v1812 = vsel %vm639, %v1809, %v1811
        %v1813 = vrot.slane %v1695, 2
        %v1814 = vrot.slane %v1696, 2
        %v1815 = vsel %vm639, %v1813, %v1814
        %v1816 = vrot.slane %v1697, 2
        %v1817 = vsel %vm639, %v1814, %v1816
        %v1818 = vrot.slane %v1698, 2
        %v1819 = vrot.slane %v1699, 2
        %v1820 = vsel %vm639, %v1818, %v1819
        %v1821 = vrot.slane %v1700, 2
        %v1822 = vsel %vm639, %v1819, %v1821
        %v1823 = vrot.slane %v1701, 2
        %v1824 = vrot.slane %v1702, 2
        %v1825 = vsel %vm639, %v1823, %v1824
        %v1826 = vrot.slane %v1703, 2
        %v1827 = vsel %vm639, %v1824, %v1826
        %v1828 = vrot.slane %v1704, 2
        %v1829 = vrot.slane %v1705, 2
        %v1830 = vsel %vm639, %v1828, %v1829
        %v1831 = vrot.slane %v1706, 2
        %v1832 = vsel %vm639, %v1829, %v1831
        %v1833 = vrot.slane %v1707, 2
        %v1834 = vrot.slane %v1708, 2
        %v1835 = vsel %vm639, %v1833, %v1834
        %v1836 = vrot.slane %v1709, 2
        %v1837 = vsel %vm639, %v1834, %v1836
        %v1870 = vadd.f32 %v1625, %v1760
        %v1871 = vadd.f32 %v1626, %v1762
        %v1872 = vadd.f32 %v1627, %v1765
        %v1873 = vadd.f32 %v1628, %v1767
        %v1874 = vadd.f32 %v1629, %v1770
        %v1875 = vadd.f32 %v1630, %v1772
        %v1876 = vadd.f32 %v1631, %v1775
        %v1877 = vadd.f32 %v1632, %v1777
        %v1878 = vadd.f32 %v1633, %v1780
        %v1879 = vadd.f32 %v1634, %v1782
        %v1880 = vadd.f32 %v1635, %v1785
        %v1881 = vadd.f32 %v1636, %v1787
        %v1882 = vadd.f32 %v1637, %v1790
        %v1883 = vadd.f32 %v1638, %v1792
        %v1884 = vadd.f32 %v1639, %v1795
        %v1885 = vadd.f32 %v1640, %v1797
        %v1886 = vadd.f32 %v1641, %v1800
        %v1887 = vadd.f32 %v1642, %v1802
        %v1888 = vadd.f32 %v1643, %v1805
        %v1889 = vadd.f32 %v1644, %v1807
        %v1890 = vadd.f32 %v1645, %v1810
        %v1891 = vadd.f32 %v1646, %v1812
        %v1892 = vadd.f32 %v1647, %v1815
        %v1893 = vadd.f32 %v1648, %v1817
        %v1894 = vadd.f32 %v1649, %v1820
        %v1895 = vadd.f32 %v1650, %v1822
        %v1896 = vadd.f32 %v1651, %v1825
        %v1897 = vadd.f32 %v1652, %v1827
        %v1898 = vadd.f32 %v1653, %v1830
        %v1899 = vadd.f32 %v1654, %v1832
        %v1900 = vadd.f32 %v1655, %v1835
        %v1901 = vadd.f32 %v1656, %v1837
        %v1902 = vld [vmem:[%s2] sm:$0xff]
        %v1903 = vld [vmem:[%s2 + $0x8] sm:$0xff]
        %vm1904 = vcmask 64512
        %v1906 = vsel %vm1904, %v1902, 0
        %v1909 = vsel %vm1904, %v1903, 0
        %v1912 = vsel %vm1904, %v1870, 0
        %v1915 = vsel %vm1904, %v1871, 0
        %v1918 = vsel %vm1904, %v1872, 0
        %v1921 = vsel %vm1904, %v1873, 0
        %v1924 = vsel %vm1904, %v1874, 0
        %v1927 = vsel %vm1904, %v1875, 0
        %v1930 = vsel %vm1904, %v1876, 0
        %v1933 = vsel %vm1904, %v1877, 0
        %v1936 = vsel %vm1904, %v1878, 0
        %v1939 = vsel %vm1904, %v1879, 0
        %v1942 = vsel %vm1904, %v1880, 0
        %v1945 = vsel %vm1904, %v1881, 0
        %v1948 = vsel %vm1904, %v1882, 0
        %v1951 = vsel %vm1904, %v1883, 0
        %v1954 = vsel %vm1904, %v1884, 0
        %v1957 = vsel %vm1904, %v1885, 0
        %v1960 = vsel %vm1904, %v1886, 0
        %v1963 = vsel %vm1904, %v1887, 0
        %v1966 = vsel %vm1904, %v1888, 0
        %v1969 = vsel %vm1904, %v1889, 0
        %v1972 = vsel %vm1904, %v1890, 0
        %v1975 = vsel %vm1904, %v1891, 0
        %v1978 = vsel %vm1904, %v1892, 0
        %v1981 = vsel %vm1904, %v1893, 0
        %v1984 = vsel %vm1904, %v1894, 0
        %v1987 = vsel %vm1904, %v1895, 0
        %v1990 = vsel %vm1904, %v1896, 0
        %v1993 = vsel %vm1904, %v1897, 0
        %v1996 = vsel %vm1904, %v1898, 0
        %v1999 = vsel %vm1904, %v1899, 0
        %v2002 = vsel %vm1904, %v1900, 0
        %v2005 = vsel %vm1904, %v1901, 0
        %2007 = vmatprep.subr.mxu0 0.0
        %2008 = vmatpush1.xpose.msra.mxu0 %v1957
        %2009 = vmatprep.subr.mxu0 0.0
        %2010 = vmatpush1.xpose.msra.mxu0 %v1954
        %2011 = vmatprep.subr.mxu0 0.0
        %2012 = vmatpush1.xpose.msra.mxu0 %v1951
        %2013 = vmatprep.subr.mxu0 0.0
        %2014 = vmatpush1.xpose.msra.mxu0 %v1948
        %2015 = vmatprep.subr.mxu0 0.0
        %2016 = vmatpush1.xpose.msra.mxu0 %v1945
        %2017 = vmatprep.subr.mxu0 0.0
        %2018 = vmatpush1.xpose.msra.mxu0 %v1942
        %2019 = vmatprep.subr.mxu0 0.0
        %2020 = vmatpush1.xpose.msra.mxu0 %v1939
        %2021 = vmatprep.subr.mxu0 0.0
        %2022 = vmatpush1.xpose.msra.mxu0 %v1936
        %2023 = vmatprep.subr.mxu0 0.0
        %2024 = vmatpush1.xpose.msra.mxu0 %v1933
        %2025 = vmatprep.subr.mxu0 0.0
        %2026 = vmatpush1.xpose.msra.mxu0 %v1930
        %2027 = vmatprep.subr.mxu0 0.0
        %2028 = vmatpush1.xpose.msra.mxu0 %v1927
        %2029 = vmatprep.subr.mxu0 0.0
        %2030 = vmatpush1.xpose.msra.mxu0 %v1924
        %2031 = vmatprep.subr.mxu0 0.0
        %2032 = vmatpush1.xpose.msra.mxu0 %v1921
        %2033 = vmatprep.subr.mxu0 0.0
        %2034 = vmatpush1.xpose.msra.mxu0 %v1918
        %2035 = vmatprep.subr.mxu0 0.0
        %2036 = vmatpush1.xpose.msra.mxu0 %v1915
        %2037 = vmatprep.subr.mxu0 0.0
        %2038 = vmatpush1.xpose.msra.mxu0 %v1912
        %2039 = vmatprep.subr.mxu0 0.0
        %2040 = vmatpush2.xpose.msra.mxu0 %v2005
        %2041 = vmatprep.subr.mxu0 0.0
        %2042 = vmatpush2.xpose.msra.mxu0 %v2002
        %2043 = vmatprep.subr.mxu0 0.0
        %2044 = vmatpush2.xpose.msra.mxu0 %v1999
        %2045 = vmatprep.subr.mxu0 0.0
        %2046 = vmatpush2.xpose.msra.mxu0 %v1996
        %2047 = vmatprep.subr.mxu0 0.0
        %2048 = vmatpush2.xpose.msra.mxu0 %v1993
        %2049 = vmatprep.subr.mxu0 0.0
        %2050 = vmatpush2.xpose.msra.mxu0 %v1990
        %2051 = vmatprep.subr.mxu0 0.0
        %2052 = vmatpush2.xpose.msra.mxu0 %v1987
        %2053 = vmatprep.subr.mxu0 0.0
        %2054 = vmatpush2.xpose.msra.mxu0 %v1984
        %2055 = vmatprep.subr.mxu0 0.0
        %2056 = vmatpush2.xpose.msra.mxu0 %v1981
        %2057 = vmatprep.subr.mxu0 0.0
        %2058 = vmatpush2.xpose.msra.mxu0 %v1978
        %2059 = vmatprep.subr.mxu0 0.0
        %2060 = vmatpush2.xpose.msra.mxu0 %v1975
        %2061 = vmatprep.subr.mxu0 0.0
        %2062 = vmatpush2.xpose.msra.mxu0 %v1972
        %2063 = vmatprep.subr.mxu0 0.0
        %2064 = vmatpush2.xpose.msra.mxu0 %v1969
        %2065 = vmatprep.subr.mxu0 0.0
        %2066 = vmatpush2.xpose.msra.mxu0 %v1966
        %2067 = vmatprep.subr.mxu0 0.0
        %2068 = vmatpush2.xpose.msra.mxu0 %v1963
        %2069 = vmatprep.subr.mxu0 0.0
        %2070 = vmatpush2.xpose.msra.mxu0 %v1960
        %2071 = vmatprep.mubr.f32.mxu0 0.0
        %2072 = vmatmul.mubr.f32.gmra.mxu0 %v1906
        %v2073 = vpop.f32.mrf.mxu0
        %v2074 = vadd.f32 0.0, %v2073
        %v2075 = vpop.f32.mrf.mxu0
        %v2076 = vadd.f32 0.0, %v2075
        %2077 = vmatprep.mubr.f32.mxu0 0.0
        %2078 = vmatmul.mubr.f32.gmra.mxu0 %v1909
        %v2079 = vpop.f32.mrf.mxu0
        %v2080 = vadd.f32 0.0, %v2079
        %v2081 = vpop.f32.mrf.mxu0
        %v2082 = vadd.f32 0.0, %v2081
        %2083 = vdwg.mxu0
        %2084 = vst [vmem:[%s163] sm:$0xff] %v2074
        %2085 = vst [vmem:[%s163 + $0x8] sm:$0xff] %v2076
        %2086 = vst [vmem:[%s163 + $0x10] sm:$0xff] %v2080
        %2087 = vst [vmem:[%s163 + $0x18] sm:$0xff] %v2082
        %s2088 = sand.u32 %s93, 1
        %s2089 = scalar_lea.sflag [#allocation3], %s2088
        %s2090 = sand.u32 %s93, 1
        %s2091 = smul.addr %s2090, 32
        %s2092 = scalar_lea.vmem [#allocation2], %s2091
        // Predicated region
        $region33: #{tpu_custom_call.1} parent=31 // pred_check
          %p2093 = pneg %p103
        $region34: #{tpu_custom_call.1} parent=31 // pred_check_branch
          %2095 = sbr.rel (%p2093) target = $region36
        $region35: #{tpu_custom_call.1} parent=31 // pred_region
          %s2097 = ssub.s32 512, 512
          %2098 = vsyncadd %s2089, %s2097
          %s2099 = smul.addr %s17, 4
          %s2100 = smul.addr %s2099, 128
          %s2101 = scalar_lea.hbm %s3, %s2100
          %s2102 = sshll.u32 %s2092, 4
          %s2103 = int_to_ptr.vmem [resolvable:$true] %s2102
          %2108 = dma.vmem_to_hbm [thread:$0]  %s2103, 512, %s2101, %s2089, 256, 256, 16
        $region36: #{tpu_custom_call.1} parent=31 // pred_fallthru
          _
      $region32: #{tpu_custom_call.1} parent=5 // pred_fallthru
        _
      %p2109 = scmp.le.s32.totalorder 2, %s12
      // Predicated region
      $region37: #{tpu_custom_call.1} parent=5 // pred_check
        %p2110 = pneg %p2109
      $region38: #{tpu_custom_call.1} parent=5 // pred_check_branch
        %2112 = sbr.rel (%p2110) target = $region40
      $region39: #{tpu_custom_call.1} parent=5 // pred_region
        %s2113 = ssub.s32 %s12, 2
        // Predicated region
        $region41: #{tpu_custom_call.1} parent=39 // pred_check
          %p2114 = pneg %p109
        $region42: #{tpu_custom_call.1} parent=39 // pred_check_branch
          %2116 = sbr.rel (%p2114) target = $region44
        $region43: #{tpu_custom_call.1} parent=39 // pred_region
          %s2117 = sand.u32 %s94, 1
          %s2118 = scalar_lea.sflag [#allocation3], %s2117
          %s2119 = sand.u32 %s94, 1
          %s2120 = smul.addr %s2119, 32
          %s2121 = scalar_lea.vmem [#allocation2], %s2120
          %2122 = dma.done %s2118, 512
        $region44: #{tpu_custom_call.1} parent=39 // pred_fallthru
          _
      $region40: #{tpu_custom_call.1} parent=5 // pred_fallthru
        _
    $region6: #{tpu_custom_call.1} parent=1 // loop_footer
      %s16 = sadd.s32 1, %s12
    $region7: #{tpu_custom_call.1} parent=1 // loop_footer_branch
      %11 = sbr.rel target = $region3
    $region8: #{tpu_custom_call.1} parent=1 // loop_exit
      _
    %2123 = vsyncpa [#allocation3], 1
    %s2124 = scalar_lea.sflag [#allocation3], 1
    %2125 = vsyncpa %s2124, 1

</llo_original>
